<compile_context>
chip_gen: v7x
topology: tpu7x:2x2x1
jax: 0.10.0
libtpu: 0.0.40
codegen_flags: <defaults>
</compile_context>

<pallas_src>
import functools

import jax
import jax.numpy as jnp
import numpy as np
from jax.experimental import pallas as pl
from jax.experimental.pallas import tpu as pltpu


# ---------------------------------------------------------------------------
# In-kernel building blocks (shared by the fused and the channel-tiled paths).
# ---------------------------------------------------------------------------

def _h_swish(y):
    return y * (jnp.clip(y + 3.0, 0.0, 6.0) * (1.0 / 6.0))


def _pools(x2, pool_mat, scale_row):
    """Both adaptive average pools as a single MXU matmul.

    x2:        (R, H*W) in the I/O dtype (bf16 feeds the MXU directly).
    pool_mat:  (H*W, H+W) 0/1 selection matrix (exact in bf16).
    scale_row: (1, H+W) f32 with 1/W (first H cols) and 1/H (last W cols).
    Returns (R, H+W) f32.
    """
    p = jnp.dot(x2, pool_mat, preferred_element_type=jnp.float32)
    return p * scale_row


def _gates(pools, w1t, b1, whT, bh, wwT, bw, H, W):
    """conv1(+folded BN) + h_swish + conv_h/conv_w + sigmoid on pooled tensor.

    pools: (Bn, C, H+W) f32 (channel-major).  All matmuls are plain 2-D,
    merged over the batch -- no materialized per-batch weight copies.
    Returns a_h: (Bn, C, H) f32 and a_w: (Bn, C, W) f32.
    """
    Bn, C, P = pools.shape
    mip = w1t.shape[1]
    # Spatial-major view so stage 1/2 are single 2-D MXU matmuls.
    pools_t = jnp.transpose(pools, (0, 2, 1)).reshape(Bn * P, C)    # tiny
    y = jnp.dot(pools_t, w1t, preferred_element_type=jnp.float32) + b1
    y = _h_swish(y)
    y3 = y.reshape(Bn, P, mip)
    y_h = y3[:, :H, :].reshape(Bn * H, mip)
    y_w = y3[:, H:, :].reshape(Bn * W, mip)
    a_h = jax.nn.sigmoid(
        jnp.dot(y_h, whT, preferred_element_type=jnp.float32) + bh)  # (Bn*H, C)
    a_w = jax.nn.sigmoid(
        jnp.dot(y_w, wwT, preferred_element_type=jnp.float32) + bw)  # (Bn*W, C)
    a_h = jnp.transpose(a_h.reshape(Bn, H, C), (0, 2, 1))            # (Bn, C, H)
    a_w = jnp.transpose(a_w.reshape(Bn, W, C), (0, 2, 1))            # (Bn, C, W)
    return a_h, a_w


def _apply(x3, a_h, a_w, eh_mat, apply_dtype, out_dtype):
    """out = x * gate_h * gate_w on the lane-dense (.., H*W) layout."""
    Bn, Cb, HW = x3.shape
    H = a_h.shape[-1]
    Wd = a_w.shape[-1]
    # gate_h: expand the per-row gate with a 0/1 MXU matmul (stays lane-dense).
    gate_h = jnp.dot(a_h.reshape(Bn * Cb, H).astype(eh_mat.dtype), eh_mat,
                     preferred_element_type=jnp.float32)
    gate_h = gate_h.reshape(Bn, Cb, HW).astype(apply_dtype)
    # gate_w: lane tile -- flat index is h*W + w, so gate_w[..h*W+w] = a_w[..w].
    aw = a_w.astype(apply_dtype)
    gate_w = jnp.broadcast_to(aw[:, :, None, :], (Bn, Cb, H, Wd)).reshape(
        Bn, Cb, HW)
    # Fused apply: only gate_h / gate_w are HW-wide temporaries (apply dtype).
    out = (x3.astype(apply_dtype) * gate_h) * gate_w
    return out.astype(out_dtype)


# ---------------------------------------------------------------------------
# Kernels.
# ---------------------------------------------------------------------------

def _coord_att_fused_kernel(x_ref, pool_ref, scale_ref, w1t_ref, b1_ref,
                            whT_ref, bh_ref, wwT_ref, bw_ref, eh_ref, o_ref,
                            *, H, W, apply_dtype):
    Bn, C, HW = x_ref.shape
    x3 = x_ref[...]
    pools = _pools(x3.reshape(Bn * C, HW), pool_ref[...], scale_ref[...])
    pools = pools.reshape(Bn, C, H + W)
    a_h, a_w = _gates(pools, w1t_ref[...], b1_ref[...], whT_ref[...],
                      bh_ref[...], wwT_ref[...], bw_ref[...], H, W)
    o_ref[...] = _apply(x3, a_h, a_w, eh_ref[...], apply_dtype, o_ref.dtype)


def _pool_kernel(x_ref, pool_ref, scale_ref, o_ref):
    Bn, Cb, HW = x_ref.shape
    P = o_ref.shape[-1]
    p = _pools(x_ref[...].reshape(Bn * Cb, HW), pool_ref[...], scale_ref[...])
    o_ref[...] = p.reshape(Bn, Cb, P)


def _gates_kernel(pools_ref, w1t_ref, b1_ref, whT_ref, bh_ref, wwT_ref, bw_ref,
                  ah_ref, aw_ref, *, H, W):
    a_h, a_w = _gates(pools_ref[...], w1t_ref[...], b1_ref[...], whT_ref[...],
                      bh_ref[...], wwT_ref[...], bw_ref[...], H, W)
    ah_ref[...] = a_h
    aw_ref[...] = a_w


def _apply_kernel(x_ref, ah_ref, aw_ref, eh_ref, o_ref, *, apply_dtype):
    o_ref[...] = _apply(x_ref[...], ah_ref[...], aw_ref[...], eh_ref[...],
                        apply_dtype, o_ref.dtype)


# ---------------------------------------------------------------------------
# Wrapper.
# ---------------------------------------------------------------------------

def _device_kind():
    try:
        return jax.devices()[0].device_kind.lower()
    except Exception:
        return ""


def _vmem_capacity_bytes(device_kind):
    try:
        return int(pltpu.get_tpu_info().vmem_capacity_bytes)
    except Exception:
        return (64 if "v7" in device_kind else 128) * 1024 * 1024


def _largest_divisor_leq(n, cap):
    cap = int(max(1, min(n, cap)))
    for d in range(cap, 0, -1):
        if n % d == 0:
            return d
    return 1


def coord_att(x, w1, b1, bn_scale, bn_shift, wh, bh, ww, bw, *,
              block_n=None, max_block_c=None, force_split=False,
              vmem_budget_bytes=None):
    """CoordAtt forward (BatchNorm in eval mode, folded into conv1)."""
    N, C, H, W = x.shape
    oup, mip = wh.shape
    assert oup == C, "CoordAtt final broadcast requires oup == inp (== C)"
    HW = H * W
    P = H + W
    f32 = jnp.float32
    io_dtype = x.dtype
    bf16_in = (io_dtype == jnp.bfloat16)

    kind = _device_kind()
    is_v7 = "v7" in kind
    # bf16 MXU operands whenever the input is bf16; bf16 elementwise apply only
    # on generations with a bf16 VALU (v6e / v7x).  v5e keeps f32 elementwise.
    mat_dtype = jnp.bfloat16 if bf16_in else f32
    apply_dtype = jnp.bfloat16 if (bf16_in and ("v6" in kind or is_v7)) else f32

    vmem_cap = _vmem_capacity_bytes(kind)
    if vmem_budget_bytes is None:
        vmem_budget_bytes = int(vmem_cap * 0.70)      # generation-aware budget
    vmem_limit = int(vmem_cap * 0.90)

    # ---- Parameters: fold BN (eval) into conv1; transpose for 2-D matmuls.
    w1f = (bn_scale * w1).astype(f32)                  # (mip, C)
    b1f = (bn_scale * b1 + bn_shift).astype(f32)       # (mip, 1)
    w1t = jnp.transpose(w1f)                           # (C, mip)
    b1r = jnp.reshape(b1f, (1, mip))
    whT = jnp.transpose(wh.astype(f32))                # (mip, C)
    wwT = jnp.transpose(ww.astype(f32))
    bhr = jnp.reshape(bh.astype(f32), (1, C))
    bwr = jnp.reshape(bw.astype(f32), (1, C))

    # 0/1 pooling-selection matrix (exact in bf16); averaging scales applied
    # post-matmul in f32 so the mean is exact for any H, W.
    eye_h = jnp.eye(H, dtype=f32)
    eye_w = jnp.eye(W, dtype=f32)
    pool = jnp.concatenate([jnp.repeat(eye_h, W, axis=0),
                            jnp.tile(eye_w, (H, 1))], axis=1).astype(mat_dtype)
    scale = jnp.concatenate([jnp.full((1, H), 1.0 / W, f32),
                             jnp.full((1, W), 1.0 / H, f32)], axis=1)
    eh = jnp.repeat(eye_h, W, axis=1).astype(mat_dtype)   # (H, H*W)

    x_flat = jnp.reshape(x, (N, C, HW))

    # ---- VMEM footprint estimate per (batch, channel) row of a block:
    # double-buffered in/out + HW-wide apply temporaries + small pooled rows.
    io_b = np.dtype(io_dtype).itemsize
    ap_b = np.dtype(apply_dtype).itemsize
    mat_b = np.dtype(mat_dtype).itemsize
    per_row = HW * (4 * io_b + 4 * ap_b) + P * 32
    param_bytes = 2 * (HW * P + H * HW) * mat_b + (1 << 16)
    avail = max(int(vmem_budget_bytes) - param_bytes, 0)

    def full_spec(a):
        nd = a.ndim
        return pl.BlockSpec(a.shape, lambda *_: (0,) * nd)

    fused_fits = avail > 0 and C * per_row <= avail
    want_c_tiling = force_split or (max_block_c is not None and max_block_c < C)

    if fused_fits and not want_c_tiling:
        # -------- Fused single pallas_call (whole C per block) --------
        if block_n is None:
            cand = avail // (C * per_row)
            if is_v7 and N >= 2:
                cand = min(cand, N // 2)   # keep >= 2 grid steps for the 2 TCs
            block_n = _largest_divisor_leq(N, cand)
        assert N % block_n == 0
        params = (pool, scale, w1t, b1r, whT, bhr, wwT, bwr, eh)
        kernel = functools.partial(_coord_att_fused_kernel, H=H, W=W,
                                   apply_dtype=apply_dtype)
        out_flat = pl.pallas_call(
            kernel,
            out_shape=jax.ShapeDtypeStruct((N, C, HW), io_dtype),
            grid_spec=pltpu.PrefetchScalarGridSpec(
                num_scalar_prefetch=0,
                grid=(N // block_n,),
                in_specs=[pl.BlockSpec((block_n, C, HW), lambda n: (n, 0, 0))]
                         + [full_spec(p) for p in params],
                out_specs=pl.BlockSpec((block_n, C, HW), lambda n: (n, 0, 0)),
            ),
            compiler_params=pltpu.CompilerParams(
                dimension_semantics=("parallel",),
                vmem_limit_bytes=vmem_limit),
        )(x_flat, *params)
        return jnp.reshape(out_flat, (N, C, H, W))

    # -------- Channel-tiled split path (production C*H*W sizes) --------
    bn = 1 if block_n is None else block_n
    assert N % bn == 0
    cap_c = avail // max(per_row, 1)
    if max_block_c is not None:
        cap_c = min(cap_c, max_block_c)
    cands = [d for d in range(1, C + 1) if C % d == 0 and (d == C or d % 8 == 0)]
    fitting = [d for d in cands if d <= cap_c]
    block_c = max(fitting) if fitting else min(cands)
    grid = (N // bn, C // block_c)

    # 1) Channel-tiled pooling: x -> pools (N, C, H+W) f32 (tiny output).
    pools = pl.pallas_call(
        _pool_kernel,
        out_shape=jax.ShapeDtypeStruct((N, C, P), f32),
        grid_spec=pltpu.PrefetchScalarGridSpec(
            num_scalar_prefetch=0,
            grid=grid,
            in_specs=[pl.BlockSpec((bn, block_c, HW), lambda n, c: (n, c, 0)),
                      full_spec(pool), full_spec(scale)],
            out_specs=pl.BlockSpec((bn, block_c, P), lambda n, c: (n, c, 0)),
        ),
        compiler_params=pltpu.CompilerParams(
            dimension_semantics=("parallel", "parallel"),
            vmem_limit_bytes=vmem_limit),
    )(x_flat, pool, scale)

    # 2) Tiny gate conv chain on the whole pooled tensor (single invocation).
    a_h, a_w = pl.pallas_call(
        functools.partial(_gates_kernel, H=H, W=W),
        out_shape=(jax.ShapeDtypeStruct((N, C, H), f32),
                   jax.ShapeDtypeStruct((N, C, W), f32)),
        compiler_params=pltpu.CompilerParams(vmem_limit_bytes=vmem_limit),
    )(pools, w1t, b1r, whT, bhr, wwT, bwr)

    # 3) Channel-tiled gated apply: out = x * gate_h * gate_w.
    out_flat = pl.pallas_call(
        functools.partial(_apply_kernel, apply_dtype=apply_dtype),
        out_shape=jax.ShapeDtypeStruct((N, C, HW), io_dtype),
        grid_spec=pltpu.PrefetchScalarGridSpec(
            num_scalar_prefetch=0,
            grid=grid,
            in_specs=[pl.BlockSpec((bn, block_c, HW), lambda n, c: (n, c, 0)),
                      pl.BlockSpec((bn, block_c, H), lambda n, c: (n, c, 0)),
                      pl.BlockSpec((bn, block_c, W), lambda n, c: (n, c, 0)),
                      full_spec(eh)],
            out_specs=pl.BlockSpec((bn, block_c, HW), lambda n, c: (n, c, 0)),
        ),
        compiler_params=pltpu.CompilerParams(
            dimension_semantics=("parallel", "parallel"),
            vmem_limit_bytes=vmem_limit),
    )(x_flat, a_h, a_w, eh)
    return jnp.reshape(out_flat, (N, C, H, W))


# ---------------------------------------------------------------------------
# Pure-JAX reference (mirrors the PyTorch forward, BN in eval mode).
# ---------------------------------------------------------------------------

def coord_att_ref(x, w1, b1, bn_scale, bn_shift, wh, bh, ww, bw):
    x = x.astype(jnp.float32)
    x_h = jnp.mean(x, axis=3)                              # (N, C, H)
    x_w = jnp.mean(x, axis=2)                              # (N, C, W)
    y = jnp.concatenate([x_h, x_w], axis=2)                # (N, C, H+W)
    y = jnp.einsum('mc,ncl->nml', w1, y) + b1[None]        # conv1
    y = y * bn_scale[None] + bn_shift[None]                # bn1 (eval)
    y = y * (jnp.clip(y + 3.0, 0.0, 6.0) / 6.0)            # h_swish
    H = x.shape[2]
    y_h, y_w = y[:, :, :H], y[:, :, H:]
    a_h = jax.nn.sigmoid(jnp.einsum('om,nml->nol', wh, y_h) + bh[None])
    a_w = jax.nn.sigmoid(jnp.einsum('om,nml->nol', ww, y_w) + bw[None])
    return x * a_h[:, :, :, None] * a_w[:, :, None, :]


def _make_inputs(key, N, C, H, W, reduction=32):
    mip = max(8, C // reduction)
    ks = jax.random.split(key, 10)
    x = jax.random.normal(ks[0], (N, C, H, W), jnp.float32)
    w1 = jax.random.normal(ks[1], (mip, C), jnp.float32) * 0.2
    b1 = jax.random.normal(ks[2], (mip, 1), jnp.float32) * 0.1
    wh = jax.random.normal(ks[3], (C, mip), jnp.float32) * 0.2
    bh = jax.random.normal(ks[4], (C, 1), jnp.float32) * 0.1
    ww = jax.random.normal(ks[5], (C, mip), jnp.float32) * 0.2
    bw = jax.random.normal(ks[6], (C, 1), jnp.float32) * 0.1
    # BatchNorm2d(mip) inference-mode scale/shift.
    # TODO(synk): training-mode BN (batch statistics) is not implemented.
    gamma = 1.0 + 0.1 * jax.random.normal(ks[7], (mip, 1), jnp.float32)
    beta = 0.1 * jax.random.normal(ks[8], (mip, 1), jnp.float32)
    run_mean = 0.1 * jax.random.normal(ks[9], (mip, 1), jnp.float32)
    run_var = jnp.abs(1.0 + 0.1 * jax.random.normal(ks[7], (mip, 1), jnp.float32))
    bn_scale = gamma / jnp.sqrt(run_var + 1e-5)
    bn_shift = beta - run_mean * bn_scale
    return x, (w1, b1, bn_scale, bn_shift, wh, bh, ww, bw)


if __name__ == "__main__":
    # 1) f32 I/O, fused single-call path (N, C, H, W) = (2, 4, 16, 16).
    x, params = _make_inputs(jax.random.PRNGKey(0), 2, 4, 16, 16)
    out = jax.block_until_ready(coord_att(x, *params))
    ref = coord_att_ref(x, *params)
    np.testing.assert_allclose(np.asarray(out), np.asarray(ref),
                               rtol=1e-2, atol=1e-2)

    # 2) bf16 I/O: bf16 MXU operands + bf16 apply stage (on v6e/v7x).
    xb = x.astype(jnp.bfloat16)
    out_b = jax.block_until_ready(coord_att(xb, *params))
    ref_b = coord_att_ref(xb, *params)
    np.testing.assert_allclose(np.asarray(out_b.astype(jnp.float32)),
                               np.asarray(ref_b), rtol=5e-2, atol=5e-2)

    # 3) Channel-tiled split path (structure used at production C*H*W sizes),
    #    exercised here on a small shape by forcing the split (block_c = 8).
    x2, params2 = _make_inputs(jax.random.PRNGKey(1), 2, 16, 16, 16)
    out2 = jax.block_until_ready(
        coord_att(x2, *params2, force_split=True, max_block_c=8))
    ref2 = coord_att_ref(x2, *params2)
    np.testing.assert_allclose(np.asarray(out2), np.asarray(ref2),
                               rtol=1e-2, atol=1e-2)

    print("KERNEL_OK")
</pallas_src>

<mosaic_0001>
module attributes {stable_mosaic.version = 11 : i64} {
  func.func @_coord_att_fused_kernel(%arg0: i32, %arg1: memref<2x4x256xf32, #tpu.memory_space<vmem>>, %arg2: memref<256x32xf32, #tpu.memory_space<vmem>>, %arg3: memref<1x32xf32, #tpu.memory_space<vmem>>, %arg4: memref<4x8xf32, #tpu.memory_space<vmem>>, %arg5: memref<1x8xf32, #tpu.memory_space<vmem>>, %arg6: memref<8x4xf32, #tpu.memory_space<vmem>>, %arg7: memref<1x4xf32, #tpu.memory_space<vmem>>, %arg8: memref<8x4xf32, #tpu.memory_space<vmem>>, %arg9: memref<1x4xf32, #tpu.memory_space<vmem>>, %arg10: memref<16x256xf32, #tpu.memory_space<vmem>>, %arg11: memref<2x4x256xf32, #tpu.memory_space<vmem>>) attributes {dimension_semantics = [#tpu.dimension_semantics<parallel>], iteration_bounds = array<i64: 1>, scalar_prefetch = 0 : i64, scratch_operands = 0 : i64, tpu.core_type = #tpu.core_type<tc>, window_params = [{transform_indices = @transform_0, window_bounds = array<i64: 2, 4, 256>}, {pipeline_mode = #tpu.pipeline_mode<synchronous>, transform_indices = @transform_1, window_bounds = array<i64: 256, 32>}, {pipeline_mode = #tpu.pipeline_mode<synchronous>, transform_indices = @transform_2, window_bounds = array<i64: 1, 32>}, {pipeline_mode = #tpu.pipeline_mode<synchronous>, transform_indices = @transform_3, window_bounds = array<i64: 4, 8>}, {pipeline_mode = #tpu.pipeline_mode<synchronous>, transform_indices = @transform_4, window_bounds = array<i64: 1, 8>}, {pipeline_mode = #tpu.pipeline_mode<synchronous>, transform_indices = @transform_5, window_bounds = array<i64: 8, 4>}, {pipeline_mode = #tpu.pipeline_mode<synchronous>, transform_indices = @transform_6, window_bounds = array<i64: 1, 4>}, {pipeline_mode = #tpu.pipeline_mode<synchronous>, transform_indices = @transform_7, window_bounds = array<i64: 8, 4>}, {pipeline_mode = #tpu.pipeline_mode<synchronous>, transform_indices = @transform_8, window_bounds = array<i64: 1, 4>}, {pipeline_mode = #tpu.pipeline_mode<synchronous>, transform_indices = @transform_9, window_bounds = array<i64: 16, 256>}, {transform_indices = @transform_10, window_bounds = array<i64: 2, 4, 256>}]} {
    %c0 = arith.constant 0 : index
    %c0_0 = arith.constant 0 : index
    %c0_1 = arith.constant 0 : index
    %0 = vector.load %arg1[%c0, %c0_0, %c0_1] : memref<2x4x256xf32, #tpu.memory_space<vmem>>, vector<2x4x256xf32>
    %1 = vector.shape_cast %0 : vector<2x4x256xf32> to vector<8x256xf32>
    %c0_2 = arith.constant 0 : index
    %c0_3 = arith.constant 0 : index
    %2 = vector.load %arg2[%c0_2, %c0_3] : memref<256x32xf32, #tpu.memory_space<vmem>>, vector<256x32xf32>
    %c0_4 = arith.constant 0 : index
    %c0_5 = arith.constant 0 : index
    %3 = vector.load %arg3[%c0_4, %c0_5] : memref<1x32xf32, #tpu.memory_space<vmem>>, vector<1x32xf32>
    %cst = arith.constant dense<0.000000e+00> : vector<8x32xf32>
    %4 = tpu.matmul %1, %2, %cst {dimension_numbers = #tpu.dot_dimension_numbers<[1], [0], [0], [1], [0, 0, 1, 1], [], []>} : vector<8x256xf32>, vector<256x32xf32>, vector<8x32xf32> -> vector<8x32xf32>
    %5 = vector.broadcast %3 : vector<1x32xf32> to vector<8x32xf32>
    %6 = arith.mulf %4, %5 : vector<8x32xf32>
    %7 = vector.shape_cast %6 : vector<8x32xf32> to vector<2x4x32xf32>
    %c0_6 = arith.constant 0 : index
    %c0_7 = arith.constant 0 : index
    %8 = vector.load %arg4[%c0_6, %c0_7] : memref<4x8xf32, #tpu.memory_space<vmem>>, vector<4x8xf32>
    %c0_8 = arith.constant 0 : index
    %c0_9 = arith.constant 0 : index
    %9 = vector.load %arg5[%c0_8, %c0_9] : memref<1x8xf32, #tpu.memory_space<vmem>>, vector<1x8xf32>
    %c0_10 = arith.constant 0 : index
    %c0_11 = arith.constant 0 : index
    %10 = vector.load %arg6[%c0_10, %c0_11] : memref<8x4xf32, #tpu.memory_space<vmem>>, vector<8x4xf32>
    %c0_12 = arith.constant 0 : index
    %c0_13 = arith.constant 0 : index
    %11 = vector.load %arg7[%c0_12, %c0_13] : memref<1x4xf32, #tpu.memory_space<vmem>>, vector<1x4xf32>
    %c0_14 = arith.constant 0 : index
    %c0_15 = arith.constant 0 : index
    %12 = vector.load %arg8[%c0_14, %c0_15] : memref<8x4xf32, #tpu.memory_space<vmem>>, vector<8x4xf32>
    %c0_16 = arith.constant 0 : index
    %c0_17 = arith.constant 0 : index
    %13 = vector.load %arg9[%c0_16, %c0_17] : memref<1x4xf32, #tpu.memory_space<vmem>>, vector<1x4xf32>
    %14 = tpu.transpose %7, [0, 2, 1] : vector<2x4x32xf32> -> vector<2x32x4xf32>
    %15 = vector.shape_cast %14 : vector<2x32x4xf32> to vector<64x4xf32>
    %cst_18 = arith.constant dense<0.000000e+00> : vector<64x8xf32>
    %16 = tpu.matmul %15, %8, %cst_18 {dimension_numbers = #tpu.dot_dimension_numbers<[1], [0], [0], [1], [0, 0, 1, 1], [], []>} : vector<64x4xf32>, vector<4x8xf32>, vector<64x8xf32> -> vector<64x8xf32>
    %17 = vector.broadcast %9 : vector<1x8xf32> to vector<64x8xf32>
    %18 = arith.addf %16, %17 : vector<64x8xf32>
    %cst_19 = arith.constant 3.000000e+00 : f32
    %19 = vector.broadcast %cst_19 : f32 to vector<64x8xf32>
    %20 = arith.addf %18, %19 : vector<64x8xf32>
    %cst_20 = arith.constant 0.000000e+00 : f32
    %cst_21 = arith.constant 6.000000e+00 : f32
    %21 = vector.broadcast %cst_20 : f32 to vector<64x8xf32>
    %22 = arith.maximumf %21, %20 : vector<64x8xf32>
    %23 = vector.broadcast %cst_21 : f32 to vector<64x8xf32>
    %24 = arith.minimumf %23, %22 : vector<64x8xf32>
    %cst_22 = arith.constant 0.166666672 : f32
    %25 = vector.broadcast %cst_22 : f32 to vector<64x8xf32>
    %26 = arith.mulf %24, %25 : vector<64x8xf32>
    %27 = arith.mulf %18, %26 : vector<64x8xf32>
    %28 = vector.shape_cast %27 : vector<64x8xf32> to vector<2x32x8xf32>
    %29 = vector.extract_strided_slice %28 {offsets = [0, 0, 0], sizes = [2, 16, 8], strides = [1, 1, 1]} : vector<2x32x8xf32> to vector<2x16x8xf32>
    %30 = vector.shape_cast %29 : vector<2x16x8xf32> to vector<32x8xf32>
    %31 = vector.extract_strided_slice %28 {offsets = [0, 16, 0], sizes = [2, 16, 8], strides = [1, 1, 1]} : vector<2x32x8xf32> to vector<2x16x8xf32>
    %32 = vector.shape_cast %31 : vector<2x16x8xf32> to vector<32x8xf32>
    %cst_23 = arith.constant dense<0.000000e+00> : vector<32x4xf32>
    %33 = tpu.matmul %30, %10, %cst_23 {dimension_numbers = #tpu.dot_dimension_numbers<[1], [0], [0], [1], [0, 0, 1, 1], [], []>} : vector<32x8xf32>, vector<8x4xf32>, vector<32x4xf32> -> vector<32x4xf32>
    %34 = vector.broadcast %11 : vector<1x4xf32> to vector<32x4xf32>
    %35 = arith.addf %33, %34 : vector<32x4xf32>
    %36 = arith.negf %35 : vector<32x4xf32>
    %37 = math.exp %36 : vector<32x4xf32>
    %cst_24 = arith.constant 1.000000e+00 : f32
    %38 = vector.broadcast %cst_24 : f32 to vector<32x4xf32>
    %39 = arith.addf %38, %37 : vector<32x4xf32>
    %40 = arith.divf %38, %39 : vector<32x4xf32>
    %cst_25 = arith.constant dense<0.000000e+00> : vector<32x4xf32>
    %41 = tpu.matmul %32, %12, %cst_25 {dimension_numbers = #tpu.dot_dimension_numbers<[1], [0], [0], [1], [0, 0, 1, 1], [], []>} : vector<32x8xf32>, vector<8x4xf32>, vector<32x4xf32> -> vector<32x4xf32>
    %42 = vector.broadcast %13 : vector<1x4xf32> to vector<32x4xf32>
    %43 = arith.addf %41, %42 : vector<32x4xf32>
    %44 = arith.negf %43 : vector<32x4xf32>
    %45 = math.exp %44 : vector<32x4xf32>
    %cst_26 = arith.constant 1.000000e+00 : f32
    %46 = vector.broadcast %cst_26 : f32 to vector<32x4xf32>
    %47 = arith.addf %46, %45 : vector<32x4xf32>
    %48 = arith.divf %46, %47 : vector<32x4xf32>
    %49 = vector.shape_cast %40 : vector<32x4xf32> to vector<2x16x4xf32>
    %50 = tpu.transpose %49, [0, 2, 1] : vector<2x16x4xf32> -> vector<2x4x16xf32>
    %51 = vector.shape_cast %48 : vector<32x4xf32> to vector<2x16x4xf32>
    %52 = tpu.transpose %51, [0, 2, 1] : vector<2x16x4xf32> -> vector<2x4x16xf32>
    %c0_27 = arith.constant 0 : index
    %c0_28 = arith.constant 0 : index
    %53 = vector.load %arg10[%c0_27, %c0_28] : memref<16x256xf32, #tpu.memory_space<vmem>>, vector<16x256xf32>
    %54 = vector.shape_cast %50 : vector<2x4x16xf32> to vector<8x16xf32>
    %cst_29 = arith.constant dense<0.000000e+00> : vector<8x256xf32>
    %55 = tpu.matmul %54, %53, %cst_29 {dimension_numbers = #tpu.dot_dimension_numbers<[1], [0], [0], [1], [0, 0, 1, 1], [], []>} : vector<8x16xf32>, vector<16x256xf32>, vector<8x256xf32> -> vector<8x256xf32>
    %56 = vector.shape_cast %55 : vector<8x256xf32> to vector<2x4x256xf32>
    %57 = vector.shape_cast %52 : vector<2x4x16xf32> to vector<2x4x1x16xf32>
    %58 = vector.shape_cast %57 : vector<2x4x1x16xf32> to vector<2x4x1x16xf32>
    %59 = vector.broadcast %58 : vector<2x4x1x16xf32> to vector<2x4x16x16xf32>
    %60 = vector.shape_cast %59 : vector<2x4x16x16xf32> to vector<2x4x256xf32>
    %61 = arith.mulf %0, %56 : vector<2x4x256xf32>
    %62 = arith.mulf %61, %60 : vector<2x4x256xf32>
    %c0_30 = arith.constant 0 : index
    %c0_31 = arith.constant 0 : index
    %c0_32 = arith.constant 0 : index
    %63 = vector.load %arg11[%c0_30, %c0_31, %c0_32] : memref<2x4x256xf32, #tpu.memory_space<vmem>>, vector<2x4x256xf32>
    tpu.vector_store %arg11[%c0_30, %c0_31, %c0_32], %62 {strides = array<i32>} : memref<2x4x256xf32, #tpu.memory_space<vmem>>, vector<2x4x256xf32>,
    return
  }
  func.func @transform_0(%arg0: i32) -> (i32, i32, i32) {
    %c0_i32 = arith.constant 0 : i32
    %c0_i32_0 = arith.constant 0 : i32
    %c0_i32_1 = arith.constant 0 : i32
    return %arg0, %c0_i32, %c0_i32_0 : i32, i32, i32
  }
  func.func @transform_1(%arg0: i32) -> (i32, i32) {
    %c0_i32 = arith.constant 0 : i32
    %c0_i32_0 = arith.constant 0 : i32
    %c0_i32_1 = arith.constant 0 : i32
    return %c0_i32, %c0_i32_0 : i32, i32
  }
  func.func @transform_2(%arg0: i32) -> (i32, i32) {
    %c0_i32 = arith.constant 0 : i32
    %c0_i32_0 = arith.constant 0 : i32
    %c0_i32_1 = arith.constant 0 : i32
    return %c0_i32, %c0_i32_0 : i32, i32
  }
  func.func @transform_3(%arg0: i32) -> (i32, i32) {
    %c0_i32 = arith.constant 0 : i32
    %c0_i32_0 = arith.constant 0 : i32
    %c0_i32_1 = arith.constant 0 : i32
    return %c0_i32, %c0_i32_0 : i32, i32
  }
  func.func @transform_4(%arg0: i32) -> (i32, i32) {
    %c0_i32 = arith.constant 0 : i32
    %c0_i32_0 = arith.constant 0 : i32
    %c0_i32_1 = arith.constant 0 : i32
    return %c0_i32, %c0_i32_0 : i32, i32
  }
  func.func @transform_5(%arg0: i32) -> (i32, i32) {
    %c0_i32 = arith.constant 0 : i32
    %c0_i32_0 = arith.constant 0 : i32
    %c0_i32_1 = arith.constant 0 : i32
    return %c0_i32, %c0_i32_0 : i32, i32
  }
  func.func @transform_6(%arg0: i32) -> (i32, i32) {
    %c0_i32 = arith.constant 0 : i32
    %c0_i32_0 = arith.constant 0 : i32
    %c0_i32_1 = arith.constant 0 : i32
    return %c0_i32, %c0_i32_0 : i32, i32
  }
  func.func @transform_7(%arg0: i32) -> (i32, i32) {
    %c0_i32 = arith.constant 0 : i32
    %c0_i32_0 = arith.constant 0 : i32
    %c0_i32_1 = arith.constant 0 : i32
    return %c0_i32, %c0_i32_0 : i32, i32
  }
  func.func @transform_8(%arg0: i32) -> (i32, i32) {
    %c0_i32 = arith.constant 0 : i32
    %c0_i32_0 = arith.constant 0 : i32
    %c0_i32_1 = arith.constant 0 : i32
    return %c0_i32, %c0_i32_0 : i32, i32
  }
  func.func @transform_9(%arg0: i32) -> (i32, i32) {
    %c0_i32 = arith.constant 0 : i32
    %c0_i32_0 = arith.constant 0 : i32
    %c0_i32_1 = arith.constant 0 : i32
    return %c0_i32, %c0_i32_0 : i32, i32
  }
  func.func @transform_10(%arg0: i32) -> (i32, i32, i32) {
    %c0_i32 = arith.constant 0 : i32
    %c0_i32_0 = arith.constant 0 : i32
    %c0_i32_1 = arith.constant 0 : i32
    return %arg0, %c0_i32, %c0_i32_0 : i32, i32, i32
  }
}

</mosaic_0001>

<llo_original>
// kernel: tpu_custom_call.1
$region0: #{tpu_custom_call.1}
  #allocation0 [shape = 'u32[]', space=smem, size = 0x4, offset = 0x4, fixed_abs, tag = 'smem constant byte address 0x4 - core index']
  #allocation1 [shape = 'u32[144,128]{1,0:T(1,128)}', space=vmem, size = 0x12000, scoped, tag = 'internal scratch']
  %s0 = inlined_call_operand.hbm [shape: f32[2,4,256], index: 0, kind: input, shape index: {}]
  %s1 = inlined_call_operand.hbm [shape: f32[256,32], index: 1, kind: input, shape index: {}]
  %s2 = inlined_call_operand.hbm [shape: f32[1,32], index: 2, kind: input, shape index: {}]
  %s3 = inlined_call_operand.hbm [shape: f32[4,8], index: 3, kind: input, shape index: {}]
  %s4 = inlined_call_operand.hbm [shape: f32[1,8], index: 4, kind: input, shape index: {}]
  %s5 = inlined_call_operand.hbm [shape: f32[8,4], index: 5, kind: input, shape index: {}]
  %s6 = inlined_call_operand.hbm [shape: f32[1,4], index: 6, kind: input, shape index: {}]
  %s7 = inlined_call_operand.hbm [shape: f32[8,4], index: 7, kind: input, shape index: {}]
  %s8 = inlined_call_operand.hbm [shape: f32[1,4], index: 8, kind: input, shape index: {}]
  %s9 = inlined_call_operand.hbm [shape: f32[16,256], index: 9, kind: input, shape index: {}]
  %s10 = inlined_call_operand.hbm [shape: f32[2,4,256], index: 10, kind: output, shape index: {}]
  %s11 = sld [smem:[#allocation0]]
  $region90: #{tpu_custom_call.1} parent=0
    _
  %s13 = ssub.s32 1, %s11
  %s14 = scalar_select 0, %s13, %s11
  $region1: #{tpu_custom_call.1} parent=0
    #allocation2 [shape = 'u8[8192]{0}', space=vmem, size = 0x2000, scoped, tag = 'input window, operand 0, single buffered']
    #allocation3 [shape = 's32[1]{0}', space=sflag, size = 0x4, scoped, tag = 'scoped memory for tpu_custom_call.1']
    #allocation4 [shape = 's32[1]{0}', space=sflag, size = 0x4, scoped, tag = 'scoped memory for tpu_custom_call.1']
    #allocation5 [shape = 'u8[131072]{0}', space=vmem, size = 0x20000, scoped, tag = 'input window, operand 1, single buffered']
    #allocation6 [shape = 's32[1]{0}', space=sflag, size = 0x4, scoped, tag = 'scoped memory for tpu_custom_call.1']
    #allocation7 [shape = 'u8[512]{0}', space=vmem, size = 0x400, scoped, tag = 'input window, operand 2, single buffered']
    #allocation8 [shape = 'u8[2048]{0}', space=vmem, size = 0x800, scoped, tag = 'input window, operand 3, single buffered']
    #allocation9 [shape = 's32[1]{0}', space=sflag, size = 0x4, scoped, tag = 'scoped memory for tpu_custom_call.1']
    #allocation10 [shape = 'u8[512]{0}', space=vmem, size = 0x400, scoped, tag = 'input window, operand 4, single buffered']
    #allocation11 [shape = 'u8[4096]{0}', space=vmem, size = 0x1000, scoped, tag = 'input window, operand 5, single buffered']
    #allocation12 [shape = 's32[1]{0}', space=sflag, size = 0x4, scoped, tag = 'scoped memory for tpu_custom_call.1']
    #allocation13 [shape = 'u8[512]{0}', space=vmem, size = 0x400, scoped, tag = 'input window, operand 6, single buffered']
    #allocation14 [shape = 'u8[4096]{0}', space=vmem, size = 0x1000, scoped, tag = 'input window, operand 7, single buffered']
    #allocation15 [shape = 's32[1]{0}', space=sflag, size = 0x4, scoped, tag = 'scoped memory for tpu_custom_call.1']
    #allocation16 [shape = 'u8[512]{0}', space=vmem, size = 0x400, scoped, tag = 'input window, operand 8, single buffered']
    #allocation17 [shape = 'u8[16384]{0}', space=vmem, size = 0x4000, scoped, tag = 'input window, operand 9, single buffered']
    #allocation18 [shape = 's32[1]{0}', space=sflag, size = 0x4, scoped, tag = 'scoped memory for tpu_custom_call.1']
    #allocation19 [shape = 'u8[8192]{0}', space=vmem, size = 0x2000, scoped, tag = 'output window, operand 0, single buffered']
    %15 = vsyncpa [#allocation3], 0
    %16 = vsyncpa [#allocation6], 0
    %17 = vsyncpa [#allocation9], 0
    %18 = vsyncpa [#allocation12], 0
    %19 = vsyncpa [#allocation15], 0
    %20 = vsyncpa [#allocation18], 0
    %21 = vsyncpa [#allocation4], 0
    // Predicated region
    $region2: #{tpu_custom_call.1} parent=1 // pred_check
      _
    $region3: #{tpu_custom_call.1} parent=1 // pred_check_branch
      %23 = sbr.rel (0) target = $region5
    $region4: #{tpu_custom_call.1} parent=1 // pred_region
      %s25 = ssub.s32 256, 256
      %26 = vsyncadd [#allocation3], %s25
      %s27 = sshll.u32 [#allocation2], 4
      %s28 = int_to_ptr.vmem [resolvable:$true] %s27
      %33 = dma.hbm_to_vmem [thread:$0]  %s0, 256, %s28, [#allocation3], 128, 128, 8
    $region5: #{tpu_custom_call.1} parent=1 // pred_fallthru
      _
    // Predicated region
    $region6: #{tpu_custom_call.1} parent=1 // pred_check
      _
    $region7: #{tpu_custom_call.1} parent=1 // pred_check_branch
      %35 = sbr.rel (0) target = $region9
    $region8: #{tpu_custom_call.1} parent=1 // pred_region
      %s37 = ssub.s32 4096, 4096
      %38 = vsyncadd [#allocation6], %s37
      %s39 = sshll.u32 [#allocation5], 4
      %s40 = int_to_ptr.vmem [resolvable:$true] %s39
      %45 = dma.hbm_to_vmem [thread:$0]  %s1, 4096, %s40, [#allocation6], 128, 128, 8
    $region9: #{tpu_custom_call.1} parent=1 // pred_fallthru
      _
    // Predicated region
    $region10: #{tpu_custom_call.1} parent=1 // pred_check
      _
    $region11: #{tpu_custom_call.1} parent=1 // pred_check_branch
      %47 = sbr.rel (0) target = $region13
    $region12: #{tpu_custom_call.1} parent=1 // pred_region
      %s49 = ssub.s32 16, 16
      %50 = vsyncadd [#allocation6], %s49
      %s52 = sshll.u32 [#allocation7], 4
      %s53 = int_to_ptr.vmem [resolvable:$true] %s52
      %55 = dma.hbm_to_vmem [thread:$0]  %s2, 16, %s53, [#allocation6]
    $region13: #{tpu_custom_call.1} parent=1 // pred_fallthru
      _
    // Predicated region
    $region14: #{tpu_custom_call.1} parent=1 // pred_check
      _
    $region15: #{tpu_custom_call.1} parent=1 // pred_check_branch
      %57 = sbr.rel (0) target = $region17
    $region16: #{tpu_custom_call.1} parent=1 // pred_region
      %s59 = ssub.s32 64, 64
      %60 = vsyncadd [#allocation9], %s59
      %s62 = sshll.u32 [#allocation8], 4
      %s63 = int_to_ptr.vmem [resolvable:$true] %s62
      %65 = dma.hbm_to_vmem [thread:$0]  %s3, 64, %s63, [#allocation9]
    $region17: #{tpu_custom_call.1} parent=1 // pred_fallthru
      _
    // Predicated region
    $region18: #{tpu_custom_call.1} parent=1 // pred_check
      _
    $region19: #{tpu_custom_call.1} parent=1 // pred_check_branch
      %67 = sbr.rel (0) target = $region21
    $region20: #{tpu_custom_call.1} parent=1 // pred_region
      %s69 = ssub.s32 16, 16
      %70 = vsyncadd [#allocation9], %s69
      %s72 = sshll.u32 [#allocation10], 4
      %s73 = int_to_ptr.vmem [resolvable:$true] %s72
      %75 = dma.hbm_to_vmem [thread:$0]  %s4, 16, %s73, [#allocation9]
    $region21: #{tpu_custom_call.1} parent=1 // pred_fallthru
      _
    // Predicated region
    $region22: #{tpu_custom_call.1} parent=1 // pred_check
      _
    $region23: #{tpu_custom_call.1} parent=1 // pred_check_branch
      %77 = sbr.rel (0) target = $region25
    $region24: #{tpu_custom_call.1} parent=1 // pred_region
      %s79 = ssub.s32 128, 128
      %80 = vsyncadd [#allocation12], %s79
      %s82 = sshll.u32 [#allocation11], 4
      %s83 = int_to_ptr.vmem [resolvable:$true] %s82
      %85 = dma.hbm_to_vmem [thread:$0]  %s5, 128, %s83, [#allocation12]
    $region25: #{tpu_custom_call.1} parent=1 // pred_fallthru
      _
    // Predicated region
    $region26: #{tpu_custom_call.1} parent=1 // pred_check
      _
    $region27: #{tpu_custom_call.1} parent=1 // pred_check_branch
      %87 = sbr.rel (0) target = $region29
    $region28: #{tpu_custom_call.1} parent=1 // pred_region
      %s89 = ssub.s32 16, 16
      %90 = vsyncadd [#allocation12], %s89
      %s92 = sshll.u32 [#allocation13], 4
      %s93 = int_to_ptr.vmem [resolvable:$true] %s92
      %95 = dma.hbm_to_vmem [thread:$0]  %s6, 16, %s93, [#allocation12]
    $region29: #{tpu_custom_call.1} parent=1 // pred_fallthru
      _
    // Predicated region
    $region30: #{tpu_custom_call.1} parent=1 // pred_check
      _
    $region31: #{tpu_custom_call.1} parent=1 // pred_check_branch
      %97 = sbr.rel (0) target = $region33
    $region32: #{tpu_custom_call.1} parent=1 // pred_region
      %s99 = ssub.s32 128, 128
      %100 = vsyncadd [#allocation15], %s99
      %s102 = sshll.u32 [#allocation14], 4
      %s103 = int_to_ptr.vmem [resolvable:$true] %s102
      %105 = dma.hbm_to_vmem [thread:$0]  %s7, 128, %s103, [#allocation15]
    $region33: #{tpu_custom_call.1} parent=1 // pred_fallthru
      _
    // Predicated region
    $region34: #{tpu_custom_call.1} parent=1 // pred_check
      _
    $region35: #{tpu_custom_call.1} parent=1 // pred_check_branch
      %107 = sbr.rel (0) target = $region37
    $region36: #{tpu_custom_call.1} parent=1 // pred_region
      %s109 = ssub.s32 16, 16
      %110 = vsyncadd [#allocation15], %s109
      %s112 = sshll.u32 [#allocation16], 4
      %s113 = int_to_ptr.vmem [resolvable:$true] %s112
      %115 = dma.hbm_to_vmem [thread:$0]  %s8, 16, %s113, [#allocation15]
    $region37: #{tpu_custom_call.1} parent=1 // pred_fallthru
      _
    // Predicated region
    $region38: #{tpu_custom_call.1} parent=1 // pred_check
      _
    $region39: #{tpu_custom_call.1} parent=1 // pred_check_branch
      %117 = sbr.rel (0) target = $region41
    $region40: #{tpu_custom_call.1} parent=1 // pred_region
      %s119 = ssub.s32 512, 512
      %120 = vsyncadd [#allocation18], %s119
      %s121 = sshll.u32 [#allocation17], 4
      %s122 = int_to_ptr.vmem [resolvable:$true] %s121
      %127 = dma.hbm_to_vmem [thread:$0]  %s9, 512, %s122, [#allocation18], 256, 256, 16
    $region41: #{tpu_custom_call.1} parent=1 // pred_fallthru
      _
    // Predicated region
    $region42: #{tpu_custom_call.1} parent=1 // pred_check
      _
    $region43: #{tpu_custom_call.1} parent=1 // pred_check_branch
      %129 = sbr.rel (0) target = $region45
    $region44: #{tpu_custom_call.1} parent=1 // pred_region
      %130 = dma.done [#allocation3], 256
    $region45: #{tpu_custom_call.1} parent=1 // pred_fallthru
      _
    // Predicated region
    $region46: #{tpu_custom_call.1} parent=1 // pred_check
      _
    $region47: #{tpu_custom_call.1} parent=1 // pred_check_branch
      %132 = sbr.rel (0) target = $region49
    $region48: #{tpu_custom_call.1} parent=1 // pred_region
      %133 = dma.done [#allocation6], 4096
    $region49: #{tpu_custom_call.1} parent=1 // pred_fallthru
      _
    // Predicated region
    $region50: #{tpu_custom_call.1} parent=1 // pred_check
      _
    $region51: #{tpu_custom_call.1} parent=1 // pred_check_branch
      %135 = sbr.rel (0) target = $region53
    $region52: #{tpu_custom_call.1} parent=1 // pred_region
      %136 = dma.done [#allocation6], 16
    $region53: #{tpu_custom_call.1} parent=1 // pred_fallthru
      _
    // Predicated region
    $region54: #{tpu_custom_call.1} parent=1 // pred_check
      _
    $region55: #{tpu_custom_call.1} parent=1 // pred_check_branch
      %138 = sbr.rel (0) target = $region57
    $region56: #{tpu_custom_call.1} parent=1 // pred_region
      %139 = dma.done [#allocation9], 64
    $region57: #{tpu_custom_call.1} parent=1 // pred_fallthru
      _
    // Predicated region
    $region58: #{tpu_custom_call.1} parent=1 // pred_check
      _
    $region59: #{tpu_custom_call.1} parent=1 // pred_check_branch
      %141 = sbr.rel (0) target = $region61
    $region60: #{tpu_custom_call.1} parent=1 // pred_region
      %142 = dma.done [#allocation9], 16
    $region61: #{tpu_custom_call.1} parent=1 // pred_fallthru
      _
    // Predicated region
    $region62: #{tpu_custom_call.1} parent=1 // pred_check
      _
    $region63: #{tpu_custom_call.1} parent=1 // pred_check_branch
      %144 = sbr.rel (0) target = $region65
    $region64: #{tpu_custom_call.1} parent=1 // pred_region
      %145 = dma.done [#allocation12], 128
    $region65: #{tpu_custom_call.1} parent=1 // pred_fallthru
      _
    // Predicated region
    $region66: #{tpu_custom_call.1} parent=1 // pred_check
      _
    $region67: #{tpu_custom_call.1} parent=1 // pred_check_branch
      %147 = sbr.rel (0) target = $region69
    $region68: #{tpu_custom_call.1} parent=1 // pred_region
      %148 = dma.done [#allocation12], 16
    $region69: #{tpu_custom_call.1} parent=1 // pred_fallthru
      _
    // Predicated region
    $region70: #{tpu_custom_call.1} parent=1 // pred_check
      _
    $region71: #{tpu_custom_call.1} parent=1 // pred_check_branch
      %150 = sbr.rel (0) target = $region73
    $region72: #{tpu_custom_call.1} parent=1 // pred_region
      %151 = dma.done [#allocation15], 128
    $region73: #{tpu_custom_call.1} parent=1 // pred_fallthru
      _
    // Predicated region
    $region74: #{tpu_custom_call.1} parent=1 // pred_check
      _
    $region75: #{tpu_custom_call.1} parent=1 // pred_check_branch
      %153 = sbr.rel (0) target = $region77
    $region76: #{tpu_custom_call.1} parent=1 // pred_region
      %154 = dma.done [#allocation15], 16
    $region77: #{tpu_custom_call.1} parent=1 // pred_fallthru
      _
    // Predicated region
    $region78: #{tpu_custom_call.1} parent=1 // pred_check
      _
    $region79: #{tpu_custom_call.1} parent=1 // pred_check_branch
      %156 = sbr.rel (0) target = $region81
    $region80: #{tpu_custom_call.1} parent=1 // pred_region
      %157 = dma.done [#allocation18], 512
    $region81: #{tpu_custom_call.1} parent=1 // pred_fallthru
      _
    %v158 = vld [vmem:[#allocation2] sm:$0xff]
    %v159 = vld [vmem:[#allocation2 + $0x8] sm:$0xff]
    %v160 = vld [vmem:[#allocation5] sm:$0xff]
    %v161 = vld [vmem:[#allocation5 + $0x8] sm:$0xff]
    %v162 = vld [vmem:[#allocation5 + $0x10] sm:$0xff]
    %v163 = vld [vmem:[#allocation5 + $0x18] sm:$0xff]
    %v164 = vld [vmem:[#allocation5 + $0x20] sm:$0xff]
    %v165 = vld [vmem:[#allocation5 + $0x28] sm:$0xff]
    %v166 = vld [vmem:[#allocation5 + $0x30] sm:$0xff]
    %v167 = vld [vmem:[#allocation5 + $0x38] sm:$0xff]
    %v168 = vld [vmem:[#allocation5 + $0x40] sm:$0xff]
    %v169 = vld [vmem:[#allocation5 + $0x48] sm:$0xff]
    %v170 = vld [vmem:[#allocation5 + $0x50] sm:$0xff]
    %v171 = vld [vmem:[#allocation5 + $0x58] sm:$0xff]
    %v172 = vld [vmem:[#allocation5 + $0x60] sm:$0xff]
    %v173 = vld [vmem:[#allocation5 + $0x68] sm:$0xff]
    %v174 = vld [vmem:[#allocation5 + $0x70] sm:$0xff]
    %v175 = vld [vmem:[#allocation5 + $0x78] sm:$0xff]
    %v176 = vld [vmem:[#allocation5 + $0x80] sm:$0xff]
    %v177 = vld [vmem:[#allocation5 + $0x88] sm:$0xff]
    %v178 = vld [vmem:[#allocation5 + $0x90] sm:$0xff]
    %v179 = vld [vmem:[#allocation5 + $0x98] sm:$0xff]
    %v180 = vld [vmem:[#allocation5 + $0xa0] sm:$0xff]
    %v181 = vld [vmem:[#allocation5 + $0xa8] sm:$0xff]
    %v182 = vld [vmem:[#allocation5 + $0xb0] sm:$0xff]
    %v183 = vld [vmem:[#allocation5 + $0xb8] sm:$0xff]
    %v184 = vld [vmem:[#allocation5 + $0xc0] sm:$0xff]
    %v185 = vld [vmem:[#allocation5 + $0xc8] sm:$0xff]
    %v186 = vld [vmem:[#allocation5 + $0xd0] sm:$0xff]
    %v187 = vld [vmem:[#allocation5 + $0xd8] sm:$0xff]
    %v188 = vld [vmem:[#allocation5 + $0xe0] sm:$0xff]
    %v189 = vld [vmem:[#allocation5 + $0xe8] sm:$0xff]
    %v190 = vld [vmem:[#allocation5 + $0xf0] sm:$0xff]
    %v191 = vld [vmem:[#allocation5 + $0xf8] sm:$0xff]
    %v192 = vld [vmem:[#allocation7] sm:$0x1]
    %v195 = vcombine.low %v158, %v159
    %v196 = vcombine.high %v158, %v159
    %199 = vmatprep.subr.mxu0 0.0
    %200 = vmatpush1.msra.mxu0 %v160
    %201 = vmatprep.subr.mxu0 0.0
    %202 = vmatpush1.msra.mxu0 %v161
    %203 = vmatprep.subr.mxu0 0.0
    %204 = vmatpush1.msra.mxu0 %v162
    %205 = vmatprep.subr.mxu0 0.0
    %206 = vmatpush1.msra.mxu0 %v163
    %207 = vmatprep.subr.mxu0 0.0
    %208 = vmatpush1.msra.mxu0 %v164
    %209 = vmatprep.subr.mxu0 0.0
    %210 = vmatpush1.msra.mxu0 %v165
    %211 = vmatprep.subr.mxu0 0.0
    %212 = vmatpush1.msra.mxu0 %v166
    %213 = vmatprep.subr.mxu0 0.0
    %214 = vmatpush1.msra.mxu0 %v167
    %215 = vmatprep.subr.mxu0 0.0
    %216 = vmatpush1.msra.mxu0 %v168
    %217 = vmatprep.subr.mxu0 0.0
    %218 = vmatpush1.msra.mxu0 %v169
    %219 = vmatprep.subr.mxu0 0.0
    %220 = vmatpush1.msra.mxu0 %v170
    %221 = vmatprep.subr.mxu0 0.0
    %222 = vmatpush1.msra.mxu0 %v171
    %223 = vmatprep.subr.mxu0 0.0
    %224 = vmatpush1.msra.mxu0 %v172
    %225 = vmatprep.subr.mxu0 0.0
    %226 = vmatpush1.msra.mxu0 %v173
    %227 = vmatprep.subr.mxu0 0.0
    %228 = vmatpush1.msra.mxu0 %v174
    %229 = vmatprep.subr.mxu0 0.0
    %230 = vmatpush1.msra.mxu0 %v175
    %231 = vmatprep.subr.mxu0 0.0
    %232 = vmatpush1.msra.mxu0 %v176
    %233 = vmatprep.subr.mxu0 0.0
    %234 = vmatpush1.msra.mxu0 %v177
    %235 = vmatprep.subr.mxu0 0.0
    %236 = vmatpush1.msra.mxu0 %v178
    %237 = vmatprep.subr.mxu0 0.0
    %238 = vmatpush1.msra.mxu0 %v179
    %239 = vmatprep.subr.mxu0 0.0
    %240 = vmatpush1.msra.mxu0 %v180
    %241 = vmatprep.subr.mxu0 0.0
    %242 = vmatpush1.msra.mxu0 %v181
    %243 = vmatprep.subr.mxu0 0.0
    %244 = vmatpush1.msra.mxu0 %v182
    %245 = vmatprep.subr.mxu0 0.0
    %246 = vmatpush1.msra.mxu0 %v183
    %247 = vmatprep.subr.mxu0 0.0
    %248 = vmatpush1.msra.mxu0 %v184
    %249 = vmatprep.subr.mxu0 0.0
    %250 = vmatpush1.msra.mxu0 %v185
    %251 = vmatprep.subr.mxu0 0.0
    %252 = vmatpush1.msra.mxu0 %v186
    %253 = vmatprep.subr.mxu0 0.0
    %254 = vmatpush1.msra.mxu0 %v187
    %255 = vmatprep.subr.mxu0 0.0
    %256 = vmatpush1.msra.mxu0 %v188
    %257 = vmatprep.subr.mxu0 0.0
    %258 = vmatpush1.msra.mxu0 %v189
    %259 = vmatprep.subr.mxu0 0.0
    %260 = vmatpush1.msra.mxu0 %v190
    %261 = vmatprep.subr.mxu0 0.0
    %262 = vmatpush1.msra.mxu0 %v191
    %263 = vmatprep.mubr.f32.mxu0 %v196
    %264 = vmatmul.mubr.f32.gmra.mrb[0].mxu0 %v195
    %v265 = vpop.f32.mrb[0].mxu0
    %v266 = vadd.f32 0.0, %v265
    %v267 = vpop.f32.mrb[0].mxu0
    %268 = vdwg.mxu0
    %v270 = vlaneseq
    %v271 = vshrl.u32 %v270, 7
    %v272 = vsub.s32 0, %v271
    %v273 = vrot.slane %v192, %v272
    %v275 = vmul.f32 %v266, %v273
    %v277 = vcombine.high %v275, %v275
    %v279 = vld [vmem:[#allocation8] sm:$0xf]
    %v280 = vld [vmem:[#allocation10] sm:$0x1]
    %v281 = vld [vmem:[#allocation11] sm:$0xff]
    %v282 = vld [vmem:[#allocation13] sm:$0x1]
    %v283 = vld [vmem:[#allocation14] sm:$0xff]
    %v284 = vld [vmem:[#allocation16] sm:$0x1]
    %285 = vxpose.xlu0.b32.start [1/16] %v275, 128
    %286 = vxpose.xlu0.b32.cont [2/16] 0.0, 128
    %287 = vxpose.xlu0.b32.cont [3/16] 0.0, 128
    %288 = vxpose.xlu0.b32.cont [4/16] 0.0, 128
    %289 = vxpose.xlu0.b32.cont [5/16] 0.0, 128
    %290 = vxpose.xlu0.b32.cont [6/16] 0.0, 128
    %291 = vxpose.xlu0.b32.cont [7/16] 0.0, 128
    %292 = vxpose.xlu0.b32.cont [8/16] 0.0, 128
    %293 = vxpose.xlu0.b32.cont [9/16] 0.0, 128
    %294 = vxpose.xlu0.b32.cont [10/16] 0.0, 128
    %295 = vxpose.xlu0.b32.cont [11/16] 0.0, 128
    %296 = vxpose.xlu0.b32.cont [12/16] 0.0, 128
    %297 = vxpose.xlu0.b32.cont [13/16] 0.0, 128
    %298 = vxpose.xlu0.b32.cont [14/16] 0.0, 128
    %299 = vxpose.xlu0.b32.cont [15/16] 0.0, 128
    %300 = vxpose.xlu0.b32.end [16/16] 0.0, 128
    %v301 = vpop.trf.xlu0
    %v302 = vpop.trf.xlu0
    %v303 = vpop.trf.xlu0
    %v304 = vpop.trf.xlu0
    %v305 = vpop.trf.xlu0
    %v306 = vpop.trf.xlu0
    %v307 = vpop.trf.xlu0
    %v308 = vpop.trf.xlu0
    %v309 = vpop.trf.xlu0
    %v310 = vpop.trf.xlu0
    %v311 = vpop.trf.xlu0
    %v312 = vpop.trf.xlu0
    %v313 = vpop.trf.xlu0
    %v314 = vpop.trf.xlu0
    %v315 = vpop.trf.xlu0
    %v316 = vpop.trf.xlu0
    %317 = vxpose.xlu0.b32.start [1/16] %v277, 128
    %318 = vxpose.xlu0.b32.cont [2/16] 0.0, 128
    %319 = vxpose.xlu0.b32.cont [3/16] 0.0, 128
    %320 = vxpose.xlu0.b32.cont [4/16] 0.0, 128
    %321 = vxpose.xlu0.b32.cont [5/16] 0.0, 128
    %322 = vxpose.xlu0.b32.cont [6/16] 0.0, 128
    %323 = vxpose.xlu0.b32.cont [7/16] 0.0, 128
    %324 = vxpose.xlu0.b32.cont [8/16] 0.0, 128
    %325 = vxpose.xlu0.b32.cont [9/16] 0.0, 128
    %326 = vxpose.xlu0.b32.cont [10/16] 0.0, 128
    %327 = vxpose.xlu0.b32.cont [11/16] 0.0, 128
    %328 = vxpose.xlu0.b32.cont [12/16] 0.0, 128
    %329 = vxpose.xlu0.b32.cont [13/16] 0.0, 128
    %330 = vxpose.xlu0.b32.cont [14/16] 0.0, 128
    %331 = vxpose.xlu0.b32.cont [15/16] 0.0, 128
    %332 = vxpose.xlu0.b32.end [16/16] 0.0, 128
    %v333 = vpop.trf.xlu0
    %v334 = vpop.trf.xlu0
    %v335 = vpop.trf.xlu0
    %v336 = vpop.trf.xlu0
    %v337 = vpop.trf.xlu0
    %v338 = vpop.trf.xlu0
    %v339 = vpop.trf.xlu0
    %v340 = vpop.trf.xlu0
    %v341 = vpop.trf.xlu0
    %v342 = vpop.trf.xlu0
    %v343 = vpop.trf.xlu0
    %v344 = vpop.trf.xlu0
    %v345 = vpop.trf.xlu0
    %v346 = vpop.trf.xlu0
    %v347 = vpop.trf.xlu0
    %v348 = vpop.trf.xlu0
    %v350 = vlaneseq
    %v351 = vshrl.u32 %v350, 7
    %v352 = vsub.s32 0, %v351
    %v353 = vrot.slane %v280, %v352
    %vm355 = vcmask 31744
    %v357 = vsel %vm355, %v301, 0
    %v360 = vsel %vm355, %v302, 0
    %v363 = vsel %vm355, %v303, 0
    %v366 = vsel %vm355, %v304, 0
    %v369 = vsel %vm355, %v333, 0
    %v372 = vsel %vm355, %v334, 0
    %v375 = vsel %vm355, %v335, 0
    %v378 = vsel %vm355, %v336, 0
    %vm380 = vcmask 1043456
    %v382 = vsel %vm380, %v279, 0
    %384 = vmatprep.subr.mxu0 0.0
    %385 = vmatpush1.msra.mxu0 %v382
    %386 = vmatprep.subr.mxu0 0.0
    %387 = vmatpush1.msra.mxu0 0.0
    %388 = vmatprep.subr.mxu0 0.0
    %389 = vmatpush1.msra.mxu0 0.0
    %390 = vmatprep.subr.mxu0 0.0
    %391 = vmatpush1.msra.mxu0 0.0
    %392 = vmatprep.subr.mxu0 0.0
    %393 = vmatpush1.msra.mxu0 0.0
    %394 = vmatprep.subr.mxu0 0.0
    %395 = vmatpush1.msra.mxu0 0.0
    %396 = vmatprep.subr.mxu0 0.0
    %397 = vmatpush1.msra.mxu0 0.0
    %398 = vmatprep.subr.mxu0 0.0
    %399 = vmatpush1.msra.mxu0 0.0
    %400 = vmatprep.subr.mxu0 0.0
    %401 = vmatpush1.msra.mxu0 0.0
    %402 = vmatprep.subr.mxu0 0.0
    %403 = vmatpush1.msra.mxu0 0.0
    %404 = vmatprep.subr.mxu0 0.0
    %405 = vmatpush1.msra.mxu0 0.0
    %406 = vmatprep.subr.mxu0 0.0
    %407 = vmatpush1.msra.mxu0 0.0
    %408 = vmatprep.subr.mxu0 0.0
    %409 = vmatpush1.msra.mxu0 0.0
    %410 = vmatprep.subr.mxu0 0.0
    %411 = vmatpush1.msra.mxu0 0.0
    %412 = vmatprep.subr.mxu0 0.0
    %413 = vmatpush1.msra.mxu0 0.0
    %414 = vmatprep.subr.mxu0 0.0
    %415 = vmatpush1.msra.mxu0 0.0
    %416 = vmatprep.subr.mxu0 0.0
    %417 = vmatpush1.msra.mxu0 0.0
    %418 = vmatprep.subr.mxu0 0.0
    %419 = vmatpush1.msra.mxu0 0.0
    %420 = vmatprep.subr.mxu0 0.0
    %421 = vmatpush1.msra.mxu0 0.0
    %422 = vmatprep.subr.mxu0 0.0
    %423 = vmatpush1.msra.mxu0 0.0
    %424 = vmatprep.subr.mxu0 0.0
    %425 = vmatpush1.msra.mxu0 0.0
    %426 = vmatprep.subr.mxu0 0.0
    %427 = vmatpush1.msra.mxu0 0.0
    %428 = vmatprep.subr.mxu0 0.0
    %429 = vmatpush1.msra.mxu0 0.0
    %430 = vmatprep.subr.mxu0 0.0
    %431 = vmatpush1.msra.mxu0 0.0
    %432 = vmatprep.subr.mxu0 0.0
    %433 = vmatpush1.msra.mxu0 0.0
    %434 = vmatprep.subr.mxu0 0.0
    %435 = vmatpush1.msra.mxu0 0.0
    %436 = vmatprep.subr.mxu0 0.0
    %437 = vmatpush1.msra.mxu0 0.0
    %438 = vmatprep.subr.mxu0 0.0
    %439 = vmatpush1.msra.mxu0 0.0
    %440 = vmatprep.subr.mxu0 0.0
    %441 = vmatpush1.msra.mxu0 0.0
    %442 = vmatprep.subr.mxu0 0.0
    %443 = vmatpush1.msra.mxu0 0.0
    %444 = vmatprep.subr.mxu0 0.0
    %445 = vmatpush1.msra.mxu0 0.0
    %446 = vmatprep.subr.mxu0 0.0
    %447 = vmatpush1.msra.mxu0 0.0
    %448 = vmatprep.mubr.f32.mxu0 0.0
    %449 = vmatmul.mubr.f32.gmra.mrb[0].mxu0 %v357
    %v450 = vpop.f32.mrb[0].mxu0
    %v451 = vadd.f32 %v353, %v450
    %v452 = vpop.f32.mrb[0].mxu0
    %453 = vmatprep.mubr.f32.mxu0 0.0
    %454 = vmatmul.mubr.f32.gmra.mrb[0].mxu0 %v360
    %v455 = vpop.f32.mrb[0].mxu0
    %v456 = vadd.f32 %v353, %v455
    %v457 = vpop.f32.mrb[0].mxu0
    %458 = vmatprep.mubr.f32.mxu0 0.0
    %459 = vmatmul.mubr.f32.gmra.mrb[0].mxu0 %v363
    %v460 = vpop.f32.mrb[0].mxu0
    %v461 = vadd.f32 %v353, %v460
    %v462 = vpop.f32.mrb[0].mxu0
    %463 = vmatprep.mubr.f32.mxu0 0.0
    %464 = vmatmul.mubr.f32.gmra.mrb[0].mxu0 %v366
    %v465 = vpop.f32.mrb[0].mxu0
    %v466 = vadd.f32 %v353, %v465
    %v467 = vpop.f32.mrb[0].mxu0
    %468 = vmatprep.mubr.f32.mxu0 0.0
    %469 = vmatmul.mubr.f32.gmra.mrb[0].mxu0 %v369
    %v470 = vpop.f32.mrb[0].mxu0
    %v471 = vadd.f32 %v353, %v470
    %v472 = vpop.f32.mrb[0].mxu0
    %473 = vmatprep.mubr.f32.mxu0 0.0
    %474 = vmatmul.mubr.f32.gmra.mrb[0].mxu0 %v372
    %v475 = vpop.f32.mrb[0].mxu0
    %v476 = vadd.f32 %v353, %v475
    %v477 = vpop.f32.mrb[0].mxu0
    %478 = vmatprep.mubr.f32.mxu0 0.0
    %479 = vmatmul.mubr.f32.gmra.mrb[0].mxu0 %v375
    %v480 = vpop.f32.mrb[0].mxu0
    %v481 = vadd.f32 %v353, %v480
    %v482 = vpop.f32.mrb[0].mxu0
    %483 = vmatprep.mubr.f32.mxu0 0.0
    %484 = vmatmul.mubr.f32.gmra.mrb[0].mxu0 %v378
    %v485 = vpop.f32.mrb[0].mxu0
    %v486 = vadd.f32 %v353, %v485
    %v487 = vpop.f32.mrb[0].mxu0
    %488 = vdwg.mxu0
    %v489 = vadd.f32 %v451, 3.0
    %v490 = vadd.f32 %v456, 3.0
    %v491 = vadd.f32 %v461, 3.0
    %v492 = vadd.f32 %v466, 3.0
    %v493 = vadd.f32 %v471, 3.0
    %v494 = vadd.f32 %v476, 3.0
    %v495 = vadd.f32 %v481, 3.0
    %v496 = vadd.f32 %v486, 3.0
    %v497 = vmax.f32 %v489, 0.0
    %v498 = vmax.f32 %v490, 0.0
    %v499 = vmax.f32 %v491, 0.0
    %v500 = vmax.f32 %v492, 0.0
    %v501 = vmax.f32 %v493, 0.0
    %v502 = vmax.f32 %v494, 0.0
    %v503 = vmax.f32 %v495, 0.0
    %v504 = vmax.f32 %v496, 0.0
    %v505 = vmin.f32 %v497, 6.0
    %v506 = vmin.f32 %v498, 6.0
    %v507 = vmin.f32 %v499, 6.0
    %v508 = vmin.f32 %v500, 6.0
    %v509 = vmin.f32 %v501, 6.0
    %v510 = vmin.f32 %v502, 6.0
    %v511 = vmin.f32 %v503, 6.0
    %v512 = vmin.f32 %v504, 6.0
    %v513 = vmul.f32 %v505, 0.16666667
    %v514 = vmul.f32 %v506, 0.16666667
    %v515 = vmul.f32 %v507, 0.16666667
    %v516 = vmul.f32 %v508, 0.16666667
    %v517 = vmul.f32 %v509, 0.16666667
    %v518 = vmul.f32 %v510, 0.16666667
    %v519 = vmul.f32 %v511, 0.16666667
    %v520 = vmul.f32 %v512, 0.16666667
    %v521 = vmul.f32 %v451, %v513
    %v522 = vmul.f32 %v456, %v514
    %v523 = vmul.f32 %v461, %v515
    %v524 = vmul.f32 %v466, %v516
    %v525 = vmul.f32 %v471, %v517
    %v526 = vmul.f32 %v476, %v518
    %v527 = vmul.f32 %v481, %v519
    %v528 = vmul.f32 %v486, %v520
    %v530 = vlaneseq
    %v531 = vshrl.u32 %v530, 7
    %v532 = vsub.s32 0, %v531
    %v533 = vrot.slane %v282, %v532
    %vm535 = vcmask 64512
    %v537 = vsel %vm535, %v521, 0
    %v540 = vsel %vm535, %v522, 0
    %v543 = vsel %vm535, %v525, 0
    %v546 = vsel %vm535, %v526, 0
    %548 = vmatprep.subr.mxu0 0.0
    %549 = vmatpush1.msra.mxu0 %v281
    %550 = vmatprep.subr.mxu0 0.0
    %551 = vmatpush1.msra.mxu0 0.0
    %552 = vmatprep.subr.mxu0 0.0
    %553 = vmatpush1.msra.mxu0 0.0
    %554 = vmatprep.subr.mxu0 0.0
    %555 = vmatpush1.msra.mxu0 0.0
    %556 = vmatprep.subr.mxu0 0.0
    %557 = vmatpush1.msra.mxu0 0.0
    %558 = vmatprep.subr.mxu0 0.0
    %559 = vmatpush1.msra.mxu0 0.0
    %560 = vmatprep.subr.mxu0 0.0
    %561 = vmatpush1.msra.mxu0 0.0
    %562 = vmatprep.subr.mxu0 0.0
    %563 = vmatpush1.msra.mxu0 0.0
    %564 = vmatprep.subr.mxu0 0.0
    %565 = vmatpush1.msra.mxu0 0.0
    %566 = vmatprep.subr.mxu0 0.0
    %567 = vmatpush1.msra.mxu0 0.0
    %568 = vmatprep.subr.mxu0 0.0
    %569 = vmatpush1.msra.mxu0 0.0
    %570 = vmatprep.subr.mxu0 0.0
    %571 = vmatpush1.msra.mxu0 0.0
    %572 = vmatprep.subr.mxu0 0.0
    %573 = vmatpush1.msra.mxu0 0.0
    %574 = vmatprep.subr.mxu0 0.0
    %575 = vmatpush1.msra.mxu0 0.0
    %576 = vmatprep.subr.mxu0 0.0
    %577 = vmatpush1.msra.mxu0 0.0
    %578 = vmatprep.subr.mxu0 0.0
    %579 = vmatpush1.msra.mxu0 0.0
    %580 = vmatprep.subr.mxu0 0.0
    %581 = vmatpush1.msra.mxu0 0.0
    %582 = vmatprep.subr.mxu0 0.0
    %583 = vmatpush1.msra.mxu0 0.0
    %584 = vmatprep.subr.mxu0 0.0
    %585 = vmatpush1.msra.mxu0 0.0
    %586 = vmatprep.subr.mxu0 0.0
    %587 = vmatpush1.msra.mxu0 0.0
    %588 = vmatprep.subr.mxu0 0.0
    %589 = vmatpush1.msra.mxu0 0.0
    %590 = vmatprep.subr.mxu0 0.0
    %591 = vmatpush1.msra.mxu0 0.0
    %592 = vmatprep.subr.mxu0 0.0
    %593 = vmatpush1.msra.mxu0 0.0
    %594 = vmatprep.subr.mxu0 0.0
    %595 = vmatpush1.msra.mxu0 0.0
    %596 = vmatprep.subr.mxu0 0.0
    %597 = vmatpush1.msra.mxu0 0.0
    %598 = vmatprep.subr.mxu0 0.0
    %599 = vmatpush1.msra.mxu0 0.0
    %600 = vmatprep.subr.mxu0 0.0
    %601 = vmatpush1.msra.mxu0 0.0
    %602 = vmatprep.subr.mxu0 0.0
    %603 = vmatpush1.msra.mxu0 0.0
    %604 = vmatprep.subr.mxu0 0.0
    %605 = vmatpush1.msra.mxu0 0.0
    %606 = vmatprep.subr.mxu0 0.0
    %607 = vmatpush1.msra.mxu0 0.0
    %608 = vmatprep.subr.mxu0 0.0
    %609 = vmatpush1.msra.mxu0 0.0
    %610 = vmatprep.subr.mxu0 0.0
    %611 = vmatpush1.msra.mxu0 0.0
    %612 = vmatprep.mubr.f32.mxu0 0.0
    %613 = vmatmul.mubr.f32.gmra.mrb[0].mxu0 %v537
    %v614 = vpop.f32.mrb[0].mxu0
    %v615 = vadd.f32 %v533, %v614
    %v616 = vpop.f32.mrb[0].mxu0
    %617 = vmatprep.mubr.f32.mxu0 0.0
    %618 = vmatmul.mubr.f32.gmra.mrb[0].mxu0 %v540
    %v619 = vpop.f32.mrb[0].mxu0
    %v620 = vadd.f32 %v533, %v619
    %v621 = vpop.f32.mrb[0].mxu0
    %622 = vmatprep.mubr.f32.mxu0 0.0
    %623 = vmatmul.mubr.f32.gmra.mrb[0].mxu0 %v543
    %v624 = vpop.f32.mrb[0].mxu0
    %v625 = vadd.f32 %v533, %v624
    %v626 = vpop.f32.mrb[0].mxu0
    %627 = vmatprep.mubr.f32.mxu0 0.0
    %628 = vmatmul.mubr.f32.gmra.mrb[0].mxu0 %v546
    %v629 = vpop.f32.mrb[0].mxu0
    %v630 = vadd.f32 %v533, %v629
    %v631 = vpop.f32.mrb[0].mxu0
    %632 = vdwg.mxu0
    %v633 = vxor.u32 %v615, 2147483648
    %v634 = vxor.u32 %v620, 2147483648
    %v635 = vxor.u32 %v625, 2147483648
    %v636 = vxor.u32 %v630, 2147483648
    %v637 = vmul.f32 %v633, 1.442695
    %v638 = vpow.pop %v637
    %v639 = vmul.f32 %v634, 1.442695
    %v640 = vpow.pop %v639
    %v641 = vmul.f32 %v635, 1.442695
    %v642 = vpow.pop %v641
    %v643 = vmul.f32 %v636, 1.442695
    %v644 = vpow.pop %v643
    %v645 = vadd.f32 %v638, 1.0
    %v646 = vadd.f32 %v640, 1.0
    %v647 = vadd.f32 %v642, 1.0
    %v648 = vadd.f32 %v644, 1.0
    %v649 = vrcp.pop %v645
    %v650 = vmul.f32 1.0, %v649
    %v651 = vrcp.pop %v646
    %v652 = vmul.f32 1.0, %v651
    %v653 = vrcp.pop %v647
    %v654 = vmul.f32 1.0, %v653
    %v655 = vrcp.pop %v648
    %v656 = vmul.f32 1.0, %v655
    %v658 = vlaneseq
    %v659 = vshrl.u32 %v658, 7
    %v660 = vsub.s32 0, %v659
    %v661 = vrot.slane %v284, %v660
    %v664 = vsel %vm535, %v523, 0
    %v667 = vsel %vm535, %v524, 0
    %v670 = vsel %vm535, %v527, 0
    %v673 = vsel %vm535, %v528, 0
    %675 = vmatprep.subr.mxu0 0.0
    %676 = vmatpush1.msra.mxu0 %v283
    %677 = vmatprep.subr.mxu0 0.0
    %678 = vmatpush1.msra.mxu0 0.0
    %679 = vmatprep.subr.mxu0 0.0
    %680 = vmatpush1.msra.mxu0 0.0
    %681 = vmatprep.subr.mxu0 0.0
    %682 = vmatpush1.msra.mxu0 0.0
    %683 = vmatprep.subr.mxu0 0.0
    %684 = vmatpush1.msra.mxu0 0.0
    %685 = vmatprep.subr.mxu0 0.0
    %686 = vmatpush1.msra.mxu0 0.0
    %687 = vmatprep.subr.mxu0 0.0
    %688 = vmatpush1.msra.mxu0 0.0
    %689 = vmatprep.subr.mxu0 0.0
    %690 = vmatpush1.msra.mxu0 0.0
    %691 = vmatprep.subr.mxu0 0.0
    %692 = vmatpush1.msra.mxu0 0.0
    %693 = vmatprep.subr.mxu0 0.0
    %694 = vmatpush1.msra.mxu0 0.0
    %695 = vmatprep.subr.mxu0 0.0
    %696 = vmatpush1.msra.mxu0 0.0
    %697 = vmatprep.subr.mxu0 0.0
    %698 = vmatpush1.msra.mxu0 0.0
    %699 = vmatprep.subr.mxu0 0.0
    %700 = vmatpush1.msra.mxu0 0.0
    %701 = vmatprep.subr.mxu0 0.0
    %702 = vmatpush1.msra.mxu0 0.0
    %703 = vmatprep.subr.mxu0 0.0
    %704 = vmatpush1.msra.mxu0 0.0
    %705 = vmatprep.subr.mxu0 0.0
    %706 = vmatpush1.msra.mxu0 0.0
    %707 = vmatprep.subr.mxu0 0.0
    %708 = vmatpush1.msra.mxu0 0.0
    %709 = vmatprep.subr.mxu0 0.0
    %710 = vmatpush1.msra.mxu0 0.0
    %711 = vmatprep.subr.mxu0 0.0
    %712 = vmatpush1.msra.mxu0 0.0
    %713 = vmatprep.subr.mxu0 0.0
    %714 = vmatpush1.msra.mxu0 0.0
    %715 = vmatprep.subr.mxu0 0.0
    %716 = vmatpush1.msra.mxu0 0.0
    %717 = vmatprep.subr.mxu0 0.0
    %718 = vmatpush1.msra.mxu0 0.0
    %719 = vmatprep.subr.mxu0 0.0
    %720 = vmatpush1.msra.mxu0 0.0
    %721 = vmatprep.subr.mxu0 0.0
    %722 = vmatpush1.msra.mxu0 0.0
    %723 = vmatprep.subr.mxu0 0.0
    %724 = vmatpush1.msra.mxu0 0.0
    %725 = vmatprep.subr.mxu0 0.0
    %726 = vmatpush1.msra.mxu0 0.0
    %727 = vmatprep.subr.mxu0 0.0
    %728 = vmatpush1.msra.mxu0 0.0
    %729 = vmatprep.subr.mxu0 0.0
    %730 = vmatpush1.msra.mxu0 0.0
    %731 = vmatprep.subr.mxu0 0.0
    %732 = vmatpush1.msra.mxu0 0.0
    %733 = vmatprep.subr.mxu0 0.0
    %734 = vmatpush1.msra.mxu0 0.0
    %735 = vmatprep.subr.mxu0 0.0
    %736 = vmatpush1.msra.mxu0 0.0
    %737 = vmatprep.subr.mxu0 0.0
    %738 = vmatpush1.msra.mxu0 0.0
    %739 = vmatprep.mubr.f32.mxu0 0.0
    %740 = vmatmul.mubr.f32.gmra.mrb[0].mxu0 %v664
    %v741 = vpop.f32.mrb[0].mxu0
    %v742 = vadd.f32 %v661, %v741
    %v743 = vpop.f32.mrb[0].mxu0
    %744 = vmatprep.mubr.f32.mxu0 0.0
    %745 = vmatmul.mubr.f32.gmra.mrb[0].mxu0 %v667
    %v746 = vpop.f32.mrb[0].mxu0
    %v747 = vadd.f32 %v661, %v746
    %v748 = vpop.f32.mrb[0].mxu0
    %749 = vmatprep.mubr.f32.mxu0 0.0
    %750 = vmatmul.mubr.f32.gmra.mrb[0].mxu0 %v670
    %v751 = vpop.f32.mrb[0].mxu0
    %v752 = vadd.f32 %v661, %v751
    %v753 = vpop.f32.mrb[0].mxu0
    %754 = vmatprep.mubr.f32.mxu0 0.0
    %755 = vmatmul.mubr.f32.gmra.mrb[0].mxu0 %v673
    %v756 = vpop.f32.mrb[0].mxu0
    %v757 = vadd.f32 %v661, %v756
    %v758 = vpop.f32.mrb[0].mxu0
    %759 = vdwg.mxu0
    %v760 = vxor.u32 %v742, 2147483648
    %v761 = vxor.u32 %v747, 2147483648
    %v762 = vxor.u32 %v752, 2147483648
    %v763 = vxor.u32 %v757, 2147483648
    %v764 = vmul.f32 %v760, 1.442695
    %v765 = vpow.pop %v764
    %v766 = vmul.f32 %v761, 1.442695
    %v767 = vpow.pop %v766
    %v768 = vmul.f32 %v762, 1.442695
    %v769 = vpow.pop %v768
    %v770 = vmul.f32 %v763, 1.442695
    %v771 = vpow.pop %v770
    %v772 = vadd.f32 %v765, 1.0
    %v773 = vadd.f32 %v767, 1.0
    %v774 = vadd.f32 %v769, 1.0
    %v775 = vadd.f32 %v771, 1.0
    %v776 = vrcp.pop %v772
    %v777 = vmul.f32 1.0, %v776
    %v778 = vrcp.pop %v773
    %v779 = vmul.f32 1.0, %v778
    %v780 = vrcp.pop %v774
    %v781 = vmul.f32 1.0, %v780
    %v782 = vrcp.pop %v775
    %v783 = vmul.f32 1.0, %v782
    %784 = vxpose.xlu0.b32.start [1/16] %v650, 128
    %785 = vxpose.xlu0.b32.cont [2/16] %v652, 128
    %786 = vxpose.xlu0.b32.cont [3/16] 0.0, 128
    %787 = vxpose.xlu0.b32.cont [4/16] 0.0, 128
    %788 = vxpose.xlu0.b32.cont [5/16] 0.0, 128
    %789 = vxpose.xlu0.b32.cont [6/16] 0.0, 128
    %790 = vxpose.xlu0.b32.cont [7/16] 0.0, 128
    %791 = vxpose.xlu0.b32.cont [8/16] 0.0, 128
    %792 = vxpose.xlu0.b32.cont [9/16] 0.0, 128
    %793 = vxpose.xlu0.b32.cont [10/16] 0.0, 128
    %794 = vxpose.xlu0.b32.cont [11/16] 0.0, 128
    %795 = vxpose.xlu0.b32.cont [12/16] 0.0, 128
    %796 = vxpose.xlu0.b32.cont [13/16] 0.0, 128
    %797 = vxpose.xlu0.b32.cont [14/16] 0.0, 128
    %798 = vxpose.xlu0.b32.cont [15/16] 0.0, 128
    %799 = vxpose.xlu0.b32.end [16/16] 0.0, 128
    %v800 = vpop.trf.xlu0
    %v801 = vpop.trf.xlu0
    %v802 = vpop.trf.xlu0
    %v803 = vpop.trf.xlu0
    %v804 = vpop.trf.xlu0
    %v805 = vpop.trf.xlu0
    %v806 = vpop.trf.xlu0
    %v807 = vpop.trf.xlu0
    %v808 = vpop.trf.xlu0
    %v809 = vpop.trf.xlu0
    %v810 = vpop.trf.xlu0
    %v811 = vpop.trf.xlu0
    %v812 = vpop.trf.xlu0
    %v813 = vpop.trf.xlu0
    %v814 = vpop.trf.xlu0
    %v815 = vpop.trf.xlu0
    %816 = vxpose.xlu0.b32.start [1/16] %v654, 128
    %817 = vxpose.xlu0.b32.cont [2/16] %v656, 128
    %818 = vxpose.xlu0.b32.cont [3/16] 0.0, 128
    %819 = vxpose.xlu0.b32.cont [4/16] 0.0, 128
    %820 = vxpose.xlu0.b32.cont [5/16] 0.0, 128
    %821 = vxpose.xlu0.b32.cont [6/16] 0.0, 128
    %822 = vxpose.xlu0.b32.cont [7/16] 0.0, 128
    %823 = vxpose.xlu0.b32.cont [8/16] 0.0, 128
    %824 = vxpose.xlu0.b32.cont [9/16] 0.0, 128
    %825 = vxpose.xlu0.b32.cont [10/16] 0.0, 128
    %826 = vxpose.xlu0.b32.cont [11/16] 0.0, 128
    %827 = vxpose.xlu0.b32.cont [12/16] 0.0, 128
    %828 = vxpose.xlu0.b32.cont [13/16] 0.0, 128
    %829 = vxpose.xlu0.b32.cont [14/16] 0.0, 128
    %830 = vxpose.xlu0.b32.cont [15/16] 0.0, 128
    %831 = vxpose.xlu0.b32.end [16/16] 0.0, 128
    %v832 = vpop.trf.xlu0
    %v833 = vpop.trf.xlu0
    %v834 = vpop.trf.xlu0
    %v835 = vpop.trf.xlu0
    %v836 = vpop.trf.xlu0
    %v837 = vpop.trf.xlu0
    %v838 = vpop.trf.xlu0
    %v839 = vpop.trf.xlu0
    %v840 = vpop.trf.xlu0
    %v841 = vpop.trf.xlu0
    %v842 = vpop.trf.xlu0
    %v843 = vpop.trf.xlu0
    %v844 = vpop.trf.xlu0
    %v845 = vpop.trf.xlu0
    %v846 = vpop.trf.xlu0
    %v847 = vpop.trf.xlu0
    %848 = vxpose.xlu0.b32.start [1/16] %v777, 128
    %849 = vxpose.xlu0.b32.cont [2/16] %v779, 128
    %850 = vxpose.xlu0.b32.cont [3/16] 0.0, 128
    %851 = vxpose.xlu0.b32.cont [4/16] 0.0, 128
    %852 = vxpose.xlu0.b32.cont [5/16] 0.0, 128
    %853 = vxpose.xlu0.b32.cont [6/16] 0.0, 128
    %854 = vxpose.xlu0.b32.cont [7/16] 0.0, 128
    %855 = vxpose.xlu0.b32.cont [8/16] 0.0, 128
    %856 = vxpose.xlu0.b32.cont [9/16] 0.0, 128
    %857 = vxpose.xlu0.b32.cont [10/16] 0.0, 128
    %858 = vxpose.xlu0.b32.cont [11/16] 0.0, 128
    %859 = vxpose.xlu0.b32.cont [12/16] 0.0, 128
    %860 = vxpose.xlu0.b32.cont [13/16] 0.0, 128
    %861 = vxpose.xlu0.b32.cont [14/16] 0.0, 128
    %862 = vxpose.xlu0.b32.cont [15/16] 0.0, 128
    %863 = vxpose.xlu0.b32.end [16/16] 0.0, 128
    %v864 = vpop.trf.xlu0
    %v865 = vpop.trf.xlu0
    %v866 = vpop.trf.xlu0
    %v867 = vpop.trf.xlu0
    %v868 = vpop.trf.xlu0
    %v869 = vpop.trf.xlu0
    %v870 = vpop.trf.xlu0
    %v871 = vpop.trf.xlu0
    %v872 = vpop.trf.xlu0
    %v873 = vpop.trf.xlu0
    %v874 = vpop.trf.xlu0
    %v875 = vpop.trf.xlu0
    %v876 = vpop.trf.xlu0
    %v877 = vpop.trf.xlu0
    %v878 = vpop.trf.xlu0
    %v879 = vpop.trf.xlu0
    %880 = vxpose.xlu0.b32.start [1/16] %v781, 128
    %881 = vxpose.xlu0.b32.cont [2/16] %v783, 128
    %882 = vxpose.xlu0.b32.cont [3/16] 0.0, 128
    %883 = vxpose.xlu0.b32.cont [4/16] 0.0, 128
    %884 = vxpose.xlu0.b32.cont [5/16] 0.0, 128
    %885 = vxpose.xlu0.b32.cont [6/16] 0.0, 128
    %886 = vxpose.xlu0.b32.cont [7/16] 0.0, 128
    %887 = vxpose.xlu0.b32.cont [8/16] 0.0, 128
    %888 = vxpose.xlu0.b32.cont [9/16] 0.0, 128
    %889 = vxpose.xlu0.b32.cont [10/16] 0.0, 128
    %890 = vxpose.xlu0.b32.cont [11/16] 0.0, 128
    %891 = vxpose.xlu0.b32.cont [12/16] 0.0, 128
    %892 = vxpose.xlu0.b32.cont [13/16] 0.0, 128
    %893 = vxpose.xlu0.b32.cont [14/16] 0.0, 128
    %894 = vxpose.xlu0.b32.cont [15/16] 0.0, 128
    %895 = vxpose.xlu0.b32.end [16/16] 0.0, 128
    %v896 = vpop.trf.xlu0
    %v897 = vpop.trf.xlu0
    %v898 = vpop.trf.xlu0
    %v899 = vpop.trf.xlu0
    %v900 = vpop.trf.xlu0
    %v901 = vpop.trf.xlu0
    %v902 = vpop.trf.xlu0
    %v903 = vpop.trf.xlu0
    %v904 = vpop.trf.xlu0
    %v905 = vpop.trf.xlu0
    %v906 = vpop.trf.xlu0
    %v907 = vpop.trf.xlu0
    %v908 = vpop.trf.xlu0
    %v909 = vpop.trf.xlu0
    %v910 = vpop.trf.xlu0
    %v911 = vpop.trf.xlu0
    %v912 = vld [vmem:[#allocation17] sm:$0xff]
    %v913 = vld [vmem:[#allocation17 + $0x8] sm:$0xff]
    %v914 = vld [vmem:[#allocation17 + $0x10] sm:$0xff]
    %v915 = vld [vmem:[#allocation17 + $0x18] sm:$0xff]
    %v918 = vcombine.low %v800, %v832
    %vm919 = vcmask 130048
    %v920 = vsel %vm919, %v918, 0
    %922 = vmatprep.subr.mxu0 %v913
    %923 = vmatpush1.msra.mxu0 %v912
    %924 = vmatprep.subr.mxu0 %v915
    %925 = vmatpush1.msra.mxu0 %v914
    %926 = vmatprep.subr.mxu0 0.0
    %927 = vmatpush1.msra.mxu0 0.0
    %928 = vmatprep.subr.mxu0 0.0
    %929 = vmatpush1.msra.mxu0 0.0
    %930 = vmatprep.subr.mxu0 0.0
    %931 = vmatpush1.msra.mxu0 0.0
    %932 = vmatprep.subr.mxu0 0.0
    %933 = vmatpush1.msra.mxu0 0.0
    %934 = vmatprep.subr.mxu0 0.0
    %935 = vmatpush1.msra.mxu0 0.0
    %936 = vmatprep.subr.mxu0 0.0
    %937 = vmatpush1.msra.mxu0 0.0
    %938 = vmatprep.subr.mxu0 0.0
    %939 = vmatpush1.msra.mxu0 0.0
    %940 = vmatprep.subr.mxu0 0.0
    %941 = vmatpush1.msra.mxu0 0.0
    %942 = vmatprep.subr.mxu0 0.0
    %943 = vmatpush1.msra.mxu0 0.0
    %944 = vmatprep.subr.mxu0 0.0
    %945 = vmatpush1.msra.mxu0 0.0
    %946 = vmatprep.subr.mxu0 0.0
    %947 = vmatpush1.msra.mxu0 0.0
    %948 = vmatprep.subr.mxu0 0.0
    %949 = vmatpush1.msra.mxu0 0.0
    %950 = vmatprep.subr.mxu0 0.0
    %951 = vmatpush1.msra.mxu0 0.0
    %952 = vmatprep.subr.mxu0 0.0
    %953 = vmatpush1.msra.mxu0 0.0
    %954 = vmatprep.subr.mxu0 0.0
    %955 = vmatpush1.msra.mxu0 0.0
    %956 = vmatprep.subr.mxu0 0.0
    %957 = vmatpush1.msra.mxu0 0.0
    %958 = vmatprep.subr.mxu0 0.0
    %959 = vmatpush1.msra.mxu0 0.0
    %960 = vmatprep.subr.mxu0 0.0
    %961 = vmatpush1.msra.mxu0 0.0
    %962 = vmatprep.subr.mxu0 0.0
    %963 = vmatpush1.msra.mxu0 0.0
    %964 = vmatprep.subr.mxu0 0.0
    %965 = vmatpush1.msra.mxu0 0.0
    %966 = vmatprep.subr.mxu0 0.0
    %967 = vmatpush1.msra.mxu0 0.0
    %968 = vmatprep.subr.mxu0 0.0
    %969 = vmatpush1.msra.mxu0 0.0
    %970 = vmatprep.subr.mxu0 0.0
    %971 = vmatpush1.msra.mxu0 0.0
    %972 = vmatprep.subr.mxu0 0.0
    %973 = vmatpush1.msra.mxu0 0.0
    %974 = vmatprep.subr.mxu0 0.0
    %975 = vmatpush1.msra.mxu0 0.0
    %976 = vmatprep.subr.mxu0 0.0
    %977 = vmatpush1.msra.mxu0 0.0
    %978 = vmatprep.subr.mxu0 0.0
    %979 = vmatpush1.msra.mxu0 0.0
    %980 = vmatprep.subr.mxu0 0.0
    %981 = vmatpush1.msra.mxu0 0.0
    %982 = vmatprep.subr.mxu0 0.0
    %983 = vmatpush1.msra.mxu0 0.0
    %984 = vmatprep.subr.mxu0 0.0
    %985 = vmatpush1.msra.mxu0 0.0
    %986 = vmatprep.mubr.f32.mxu0 0.0
    %987 = vmatmul.mubr.f32.gmra.mrb[0].mxu0 %v920
    %v988 = vpop.f32.mrb[0].mxu0
    %v989 = vadd.f32 0.0, %v988
    %v990 = vpop.f32.mrb[0].mxu0
    %v991 = vadd.f32 0.0, %v990
    %992 = vdwg.mxu0
    %v995 = vcombine.low %v989, %v991
    %v996 = vcombine.high %v989, %v991
    %v1002 = vunpack.c.l.s4 1966171168
    %v1003 = vunpack.c.0.s8 %v1002
    %v1004 = vlaneseq
    %v1005 = vshrl.u32 %v1004, 7
    %v1006 = vsub.s32 %v1003, %v1005
    %v1007 = vrot.slane %v864, %v1006
    %v1008 = vcombine.high %v1007, %v1007
    %v1010 = vunpack.c.l.s4 1966171168
    %v1011 = vunpack.c.0.s8 %v1010
    %v1012 = vlaneseq
    %v1013 = vshrl.u32 %v1012, 7
    %v1014 = vsub.s32 %v1011, %v1013
    %v1015 = vrot.slane %v1007, %v1014
    %v1017 = vunpack.c.l.s4 1966171168
    %v1018 = vunpack.c.0.s8 %v1017
    %v1019 = vlaneseq
    %v1020 = vshrl.u32 %v1019, 7
    %v1021 = vsub.s32 %v1018, %v1020
    %v1022 = vrot.slane %v1008, %v1021
    %v1023 = vcombine.high %v1015, %v1015
    %v1024 = vcombine.high %v1022, %v1022
    %v1026 = vunpack.c.l.s4 1966171168
    %v1027 = vunpack.c.0.s8 %v1026
    %v1028 = vlaneseq
    %v1029 = vshrl.u32 %v1028, 7
    %v1030 = vsub.s32 %v1027, %v1029
    %v1031 = vrot.slane %v896, %v1030
    %v1032 = vcombine.high %v1031, %v1031
    %v1034 = vunpack.c.l.s4 1966171168
    %v1035 = vunpack.c.0.s8 %v1034
    %v1036 = vlaneseq
    %v1037 = vshrl.u32 %v1036, 7
    %v1038 = vsub.s32 %v1035, %v1037
    %v1039 = vrot.slane %v1031, %v1038
    %v1041 = vunpack.c.l.s4 1966171168
    %v1042 = vunpack.c.0.s8 %v1041
    %v1043 = vlaneseq
    %v1044 = vshrl.u32 %v1043, 7
    %v1045 = vsub.s32 %v1042, %v1044
    %v1046 = vrot.slane %v1032, %v1045
    %v1047 = vcombine.high %v1039, %v1039
    %v1048 = vcombine.high %v1046, %v1046
    %v1049 = vlaneseq
    %v1050 = vshrl.u32 %v1049, 7
    %v1051 = vsub.s32 0, %v1050
    %v1052 = vrot.slane %v1015, %v1051
    %v1053 = vlaneseq
    %v1054 = vshrl.u32 %v1053, 7
    %v1055 = vsub.s32 0, %v1054
    %v1056 = vrot.slane %v1022, %v1055
    %v1057 = vlaneseq
    %v1058 = vshrl.u32 %v1057, 7
    %v1059 = vsub.s32 0, %v1058
    %v1060 = vrot.slane %v1023, %v1059
    %v1061 = vlaneseq
    %v1062 = vshrl.u32 %v1061, 7
    %v1063 = vsub.s32 0, %v1062
    %v1064 = vrot.slane %v1024, %v1063
    %v1065 = vlaneseq
    %v1066 = vshrl.u32 %v1065, 7
    %v1067 = vsub.s32 0, %v1066
    %v1068 = vrot.slane %v1039, %v1067
    %v1069 = vlaneseq
    %v1070 = vshrl.u32 %v1069, 7
    %v1071 = vsub.s32 0, %v1070
    %v1072 = vrot.slane %v1046, %v1071
    %v1073 = vlaneseq
    %v1074 = vshrl.u32 %v1073, 7
    %v1075 = vsub.s32 0, %v1074
    %v1076 = vrot.slane %v1047, %v1075
    %v1077 = vlaneseq
    %v1078 = vshrl.u32 %v1077, 7
    %v1079 = vsub.s32 0, %v1078
    %v1080 = vrot.slane %v1048, %v1079
    %v1089 = vcombine.low %v1052, %v1060
    %v1090 = vcombine.high %v1052, %v1060
    %v1092 = vunpack.c.l.s4 1983009808
    %v1093 = vunpack.c.0.s8 %v1092
    %v1094 = vlaneseq
    %v1095 = vshrl.u32 %v1094, 7
    %v1096 = vsub.s32 %v1093, %v1095
    %v1097 = vrot.slane %v1089, %v1096
    %v1099 = vunpack.c.l.s4 1983009808
    %v1100 = vunpack.c.0.s8 %v1099
    %v1101 = vlaneseq
    %v1102 = vshrl.u32 %v1101, 7
    %v1103 = vsub.s32 %v1100, %v1102
    %v1104 = vrot.slane %v1090, %v1103
    %v1105 = vcombine.low %v1056, %v1064
    %v1106 = vcombine.high %v1056, %v1064
    %v1108 = vunpack.c.l.s4 1983009808
    %v1109 = vunpack.c.0.s8 %v1108
    %v1110 = vlaneseq
    %v1111 = vshrl.u32 %v1110, 7
    %v1112 = vsub.s32 %v1109, %v1111
    %v1113 = vrot.slane %v1105, %v1112
    %v1115 = vunpack.c.l.s4 1983009808
    %v1116 = vunpack.c.0.s8 %v1115
    %v1117 = vlaneseq
    %v1118 = vshrl.u32 %v1117, 7
    %v1119 = vsub.s32 %v1116, %v1118
    %v1120 = vrot.slane %v1106, %v1119
    %v1121 = vcombine.low %v1097, %v1113
    %v1122 = vcombine.high %v1097, %v1113
    %v1124 = vunpack.c.l.s4 1934713408
    %v1125 = vunpack.c.0.s8 %v1124
    %v1126 = vlaneseq
    %v1127 = vshrl.u32 %v1126, 7
    %v1128 = vsub.s32 %v1125, %v1127
    %v1129 = vrot.slane %v1121, %v1128
    %v1131 = vunpack.c.l.s4 1934713408
    %v1132 = vunpack.c.0.s8 %v1131
    %v1133 = vlaneseq
    %v1134 = vshrl.u32 %v1133, 7
    %v1135 = vsub.s32 %v1132, %v1134
    %v1136 = vrot.slane %v1122, %v1135
    %v1137 = vcombine.low %v1104, %v1120
    %v1138 = vcombine.high %v1104, %v1120
    %v1140 = vunpack.c.l.s4 1934713408
    %v1141 = vunpack.c.0.s8 %v1140
    %v1142 = vlaneseq
    %v1143 = vshrl.u32 %v1142, 7
    %v1144 = vsub.s32 %v1141, %v1143
    %v1145 = vrot.slane %v1137, %v1144
    %v1147 = vunpack.c.l.s4 1934713408
    %v1148 = vunpack.c.0.s8 %v1147
    %v1149 = vlaneseq
    %v1150 = vshrl.u32 %v1149, 7
    %v1151 = vsub.s32 %v1148, %v1150
    %v1152 = vrot.slane %v1138, %v1151
    %v1153 = vcombine.high %v1129, 0.0
    %v1154 = vcombine.high %v1136, 0.0
    %v1155 = vcombine.high %v1145, 0.0
    %v1156 = vcombine.high %v1152, 0.0
    %v1157 = vcombine.low %v1068, %v1076
    %v1158 = vcombine.high %v1068, %v1076
    %v1160 = vunpack.c.l.s4 1983009808
    %v1161 = vunpack.c.0.s8 %v1160
    %v1162 = vlaneseq
    %v1163 = vshrl.u32 %v1162, 7
    %v1164 = vsub.s32 %v1161, %v1163
    %v1165 = vrot.slane %v1157, %v1164
    %v1167 = vunpack.c.l.s4 1983009808
    %v1168 = vunpack.c.0.s8 %v1167
    %v1169 = vlaneseq
    %v1170 = vshrl.u32 %v1169, 7
    %v1171 = vsub.s32 %v1168, %v1170
    %v1172 = vrot.slane %v1158, %v1171
    %v1173 = vcombine.low %v1072, %v1080
    %v1174 = vcombine.high %v1072, %v1080
    %v1176 = vunpack.c.l.s4 1983009808
    %v1177 = vunpack.c.0.s8 %v1176
    %v1178 = vlaneseq
    %v1179 = vshrl.u32 %v1178, 7
    %v1180 = vsub.s32 %v1177, %v1179
    %v1181 = vrot.slane %v1173, %v1180
    %v1183 = vunpack.c.l.s4 1983009808
    %v1184 = vunpack.c.0.s8 %v1183
    %v1185 = vlaneseq
    %v1186 = vshrl.u32 %v1185, 7
    %v1187 = vsub.s32 %v1184, %v1186
    %v1188 = vrot.slane %v1174, %v1187
    %v1189 = vcombine.low %v1165, %v1181
    %v1190 = vcombine.high %v1165, %v1181
    %v1192 = vunpack.c.l.s4 1934713408
    %v1193 = vunpack.c.0.s8 %v1192
    %v1194 = vlaneseq
    %v1195 = vshrl.u32 %v1194, 7
    %v1196 = vsub.s32 %v1193, %v1195
    %v1197 = vrot.slane %v1189, %v1196
    %v1199 = vunpack.c.l.s4 1934713408
    %v1200 = vunpack.c.0.s8 %v1199
    %v1201 = vlaneseq
    %v1202 = vshrl.u32 %v1201, 7
    %v1203 = vsub.s32 %v1200, %v1202
    %v1204 = vrot.slane %v1190, %v1203
    %v1205 = vcombine.low %v1172, %v1188
    %v1206 = vcombine.high %v1172, %v1188
    %v1208 = vunpack.c.l.s4 1934713408
    %v1209 = vunpack.c.0.s8 %v1208
    %v1210 = vlaneseq
    %v1211 = vshrl.u32 %v1210, 7
    %v1212 = vsub.s32 %v1209, %v1211
    %v1213 = vrot.slane %v1205, %v1212
    %v1215 = vunpack.c.l.s4 1934713408
    %v1216 = vunpack.c.0.s8 %v1215
    %v1217 = vlaneseq
    %v1218 = vshrl.u32 %v1217, 7
    %v1219 = vsub.s32 %v1216, %v1218
    %v1220 = vrot.slane %v1206, %v1219
    %v1221 = vcombine.high %v1197, 0.0
    %v1222 = vcombine.high %v1204, 0.0
    %v1223 = vcombine.high %v1213, 0.0
    %v1224 = vcombine.high %v1220, 0.0
    %1227 = vrot.lane.b32.xlu0 %v1153, 16
    %v1228 = vpop.permute.xlu0 %1227
    %1229 = vrot.lane.b32.xlu0 %v1221, 16
    %v1230 = vpop.permute.xlu0 %1229
    %1235 = vrot.lane.b32.xlu0 %v1136, 32
    %v1236 = vpop.permute.xlu0 %1235
    %1237 = vrot.lane.b32.xlu0 %v1204, 32
    %v1238 = vpop.permute.xlu0 %1237
    %1243 = vrot.lane.b32.xlu0 %v1154, 48
    %v1244 = vpop.permute.xlu0 %1243
    %1245 = vrot.lane.b32.xlu0 %v1222, 48
    %v1246 = vpop.permute.xlu0 %1245
    %1251 = vrot.lane.b32.xlu0 %v1145, 64
    %v1252 = vpop.permute.xlu0 %1251
    %1253 = vrot.lane.b32.xlu0 %v1213, 64
    %v1254 = vpop.permute.xlu0 %1253
    %1259 = vrot.lane.b32.xlu0 %v1155, 80
    %v1260 = vpop.permute.xlu0 %1259
    %1261 = vrot.lane.b32.xlu0 %v1223, 80
    %v1262 = vpop.permute.xlu0 %1261
    %1267 = vrot.lane.b32.xlu0 %v1152, 96
    %v1268 = vpop.permute.xlu0 %1267
    %1269 = vrot.lane.b32.xlu0 %v1220, 96
    %v1270 = vpop.permute.xlu0 %1269
    %1275 = vrot.lane.b32.xlu0 %v1156, 112
    %v1276 = vpop.permute.xlu0 %1275
    %1277 = vrot.lane.b32.xlu0 %v1224, 112
    %v1278 = vpop.permute.xlu0 %1277
    %v1281 = vsel %vm919, %v1129, %v1228
    %v1282 = vsel %vm919, %v1197, %v1230
    %vm1283 = vcmask 261120
    %v1284 = vsel %vm1283, %v1281, %v1236
    %v1285 = vsel %vm1283, %v1282, %v1238
    %vm1286 = vcmask 392192
    %v1287 = vsel %vm1286, %v1284, %v1244
    %v1288 = vsel %vm1286, %v1285, %v1246
    %vm1289 = vcmask 523264
    %v1290 = vsel %vm1289, %v1287, %v1252
    %v1291 = vsel %vm1289, %v1288, %v1254
    %vm1292 = vcmask 654336
    %v1293 = vsel %vm1292, %v1290, %v1260
    %v1294 = vsel %vm1292, %v1291, %v1262
    %vm1295 = vcmask 785408
    %v1296 = vsel %vm1295, %v1293, %v1268
    %v1297 = vsel %vm1295, %v1294, %v1270
    %vm1298 = vcmask 916480
    %v1299 = vsel %vm1298, %v1296, %v1276
    %v1300 = vsel %vm1298, %v1297, %v1278
    %v1301 = vmul.f32 %v158, %v995
    %v1302 = vmul.f32 %v159, %v996
    %v1305 = vcombine.low %v1299, %v1299
    %v1306 = vcombine.low %v1300, %v1300
    %v1309 = vmul.f32 %v1301, %v1305
    %v1310 = vmul.f32 %v1302, %v1306
    %1311 = vst [vmem:[#allocation19] sm:$0xff] %v1309
    %1312 = vst [vmem:[#allocation19 + $0x8] sm:$0xff] %v1310
    // Predicated region
    $region82: #{tpu_custom_call.1} parent=1 // pred_check
      _
    $region83: #{tpu_custom_call.1} parent=1 // pred_check_branch
      %1314 = sbr.rel (0) target = $region85
    $region84: #{tpu_custom_call.1} parent=1 // pred_region
      %s1316 = ssub.s32 256, 256
      %1317 = vsyncadd [#allocation4], %s1316
      %s1318 = sshll.u32 [#allocation19], 4
      %s1319 = int_to_ptr.vmem [resolvable:$true] %s1318
      %1324 = dma.vmem_to_hbm [thread:$0]  %s1319, 256, %s10, [#allocation4], 128, 128, 8
    $region85: #{tpu_custom_call.1} parent=1 // pred_fallthru
      _
    // Predicated region
    $region86: #{tpu_custom_call.1} parent=1 // pred_check
      _
    $region87: #{tpu_custom_call.1} parent=1 // pred_check_branch
      %1326 = sbr.rel (0) target = $region89
    $region88: #{tpu_custom_call.1} parent=1 // pred_region
      %1327 = dma.done [#allocation4], 256
    $region89: #{tpu_custom_call.1} parent=1 // pred_fallthru
      _
    %1328 = vsyncpa [#allocation3], 1
    %1329 = vsyncpa [#allocation6], 1
    %1330 = vsyncpa [#allocation9], 1
    %1331 = vsyncpa [#allocation12], 1
    %1332 = vsyncpa [#allocation15], 1
    %1333 = vsyncpa [#allocation18], 1
    %1334 = vsyncpa [#allocation4], 1

</llo_original>
